<compile_context>
chip_gen: v6e
topology: v6e:2x2x1
jax: 0.10.0
libtpu: 0.0.40
codegen_flags: <defaults>
</compile_context>

<pallas_src>
import functools
import math

import jax
import jax.numpy as jnp
from jax.experimental import pallas as pl
from jax.experimental.pallas import tpu as pltpu

# ----------------------------- constants (COCO) ------------------------------
NUM_CLASSES = 80
NUM_ATTRIB = 5 + NUM_CLASSES                     # 85
NUM_ANCHORS_PER_SCALE = 3
LAST_LAYER_DIM = NUM_ANCHORS_PER_SCALE * NUM_ATTRIB   # 255
ANCHORS = [(10, 13), (16, 30), (33, 23), (30, 61), (62, 45), (59, 119),
           (116, 90), (156, 198), (373, 326)]
BN_EPS = 1e-5


def _rup(x, m):
    return ((x + m - 1) // m) * m


# ------------------------------ tile selection --------------------------------
def _choose_tiles(M, K, N):
    """Pick (Mp, TM, Kp, TK, Np, TN) for the fused matmul.

    * TM: 512 for large M, else round tiny M up to the bf16 sublane pack (16).
    * TK: largest of (1024|1536, ..., 128) dividing K when K is lane-aligned;
      for non-128-aligned K (stem / early layers) use a single full-dim K block
      padded only to a multiple of 16, so no 128-padded im2col is materialized.
    * TN: up to 512; capped at 256 only when there is a single M block so the
      two TensorCores on v7x can still split the j axis (irrelevant on v5e/v6e).
    """
    # --- M (sublane) ---
    if M > 512:
        Mp, TM = _rup(M, 512), 512
    else:
        Mp = _rup(M, 16)
        TM = Mp
    m_blocks = Mp // TM
    tiny_m = (m_blocks == 1 and TM <= 128)        # detection-head style matmul

    # --- K (reduction) ---
    if K % 128 == 0:
        Kp = K
        k_cands = ((1536, 1024, 768, 512, 384, 256, 128) if tiny_m
                   else (1024, 768, 512, 384, 256, 128))
        TK = next(t for t in k_cands if Kp % t == 0)
    elif K <= 2048:
        Kp = _rup(K, 16)                          # minimal zero padding
        TK = Kp                                   # single full-dim K block
    else:                                         # defensive (not hit by YOLOv3)
        Kp = _rup(K, 128)
        TK = next(t for t in (512, 256, 128) if Kp % t == 0)

    # --- N (output channels / lanes) ---
    Np = _rup(N, 128)
    if m_blocks == 1 and Np >= 512:
        n_cands = (256, 128)                      # >=2 N blocks for v7x's 2 TCs
    else:
        n_cands = (512, 384, 256, 128)
    TN = next(t for t in n_cands if Np % t == 0)
    return Mp, TM, Kp, TK, Np, TN


# -------------- fused matmul + bias + LeakyReLU (+ residual) kernel ------------
def _fused_matmul_kernel(*refs, slope, has_residual, residual_pre_act):
    if has_residual:
        x_ref, w_ref, b_ref, r_ref, o_ref, acc_ref = refs
    else:
        x_ref, w_ref, b_ref, o_ref, acc_ref = refs
        r_ref = None

    k = pl.program_id(2)

    @pl.when(k == 0)
    def _():
        acc_ref[...] = jnp.zeros_like(acc_ref)

    # bf16 x bf16 -> f32 accumulate on the MXU.
    acc_ref[...] += jnp.dot(x_ref[...], w_ref[...],
                            preferred_element_type=jnp.float32)

    @pl.when(k == pl.num_programs(2) - 1)
    def _():
        y = acc_ref[...] + b_ref[...]                       # f32 epilogue
        if has_residual and residual_pre_act:               # route split partial
            y = y + r_ref[...].astype(jnp.float32)
        if slope != 1.0:                                     # static skip for head
            y = jnp.where(y >= 0.0, y, y * slope)            # LeakyReLU
        if has_residual and not residual_pre_act:            # ResBlock: after act
            y = y + r_ref[...].astype(jnp.float32)
        o_ref[...] = y.astype(o_ref.dtype)                   # bf16 (or f32 head)


@functools.partial(jax.jit,
                   static_argnames=("slope", "out_dtype", "residual_pre_act"))
def fused_matmul(x, w, bias, residual=None, *, slope, out_dtype,
                 residual_pre_act=False):
    """y = leaky_relu(x @ w + bias) [+/- fused residual]; bf16 MXU, f32 acc."""
    M, K = x.shape
    _, N = w.shape
    Mp, TM, Kp, TK, Np, TN = _choose_tiles(M, K, N)

    xb = x.astype(jnp.bfloat16)
    wb = w.astype(jnp.bfloat16)
    if (M, K) != (Mp, Kp):                 # pad only when actually needed
        xb = jnp.pad(xb, ((0, Mp - M), (0, Kp - K)))
    if (K, N) != (Kp, Np):
        wb = jnp.pad(wb, ((0, Kp - K), (0, Np - N)))
    b2 = bias.reshape(1, N).astype(jnp.float32)
    if N != Np:
        b2 = jnp.pad(b2, ((0, 0), (0, Np - N)))

    inputs = [xb, wb, b2]
    in_specs = [
        pl.BlockSpec((TM, TK), lambda i, j, k: (i, k)),
        pl.BlockSpec((TK, TN), lambda i, j, k: (k, j)),
        pl.BlockSpec((1, TN), lambda i, j, k: (0, j)),
    ]
    has_residual = residual is not None
    if has_residual:
        r = residual
        if (M, N) != (Mp, Np):
            r = jnp.pad(r, ((0, Mp - M), (0, Np - N)))
        inputs.append(r)
        # (i, j) does not depend on k -> fetched once per output tile.
        in_specs.append(pl.BlockSpec((TM, TN), lambda i, j, k: (i, j)))

    out = pl.pallas_call(
        functools.partial(_fused_matmul_kernel, slope=float(slope),
                          has_residual=has_residual,
                          residual_pre_act=bool(residual_pre_act)),
        out_shape=jax.ShapeDtypeStruct((Mp, Np), out_dtype),
        grid_spec=pltpu.PrefetchScalarGridSpec(
            num_scalar_prefetch=0,
            grid=(Mp // TM, Np // TN, Kp // TK),
            in_specs=in_specs,
            out_specs=pl.BlockSpec((TM, TN), lambda i, j, k: (i, j)),
            scratch_shapes=[pltpu.VMEM((TM, TN), jnp.float32)],
        ),
        # "parallel" only matters on multi-TensorCore parts (v7x); harmless and
        # near-zero-impact on single-TC v5e/v6e.
        compiler_params=pltpu.CompilerParams(
            dimension_semantics=("parallel", "parallel", "arbitrary"),
            vmem_limit_bytes=32 * 1024 * 1024),
    )(*inputs)

    if (M, N) != (Mp, Np):
        out = out[:M, :N]
    return out


# ------------------------------- conv wrappers --------------------------------
def _extract_patches(x, k, stride):
    """x:(B,H,W,C) bf16 -> (B,Ho,Wo,k*k*C) with patch ordering (kh, kw, C)."""
    B, H, W, C = x.shape
    p = (k - 1) // 2
    xp = jnp.pad(x, ((0, 0), (p, p), (p, p), (0, 0)))
    Ho = (H + 2 * p - k) // stride + 1
    Wo = (W + 2 * p - k) // stride + 1
    cols = []
    for di in range(k):
        for dj in range(k):
            cols.append(xp[:, di:di + stride * (Ho - 1) + 1:stride,
                           dj:dj + stride * (Wo - 1) + 1:stride, :])
    return jnp.concatenate(cols, axis=-1), Ho, Wo


def conv_layer_fwd(x, p, stride=1, slope=0.1, out_dtype=jnp.bfloat16,
                   residual=None):
    """ConvLayer (Conv + BN(eval) + LeakyReLU), BN folded into the weights.

    `residual` (same shape as the output) is added AFTER the activation inside
    the kernel epilogue, matching the reference ResBlock `x += residual`.
    """
    k = p["k"]
    B, H, W, _ = x.shape
    xb = x.astype(jnp.bfloat16)               # no-op for bf16 activations
    if k == 1 and stride == 1:
        patches, Ho, Wo = xb, H, W
    else:
        # TODO(synk): replace this HBM im2col with a halo-DMA direct-conv kernel.
        patches, Ho, Wo = _extract_patches(xb, k, stride)
    Xm = patches.reshape(B * Ho * Wo, -1)
    r = None if residual is None else residual.reshape(B * Ho * Wo, -1)
    y = fused_matmul(Xm, p["wm"], p["b"], r, slope=slope, out_dtype=out_dtype)
    return y.reshape(B, Ho, Wo, -1)


def route_conv1(up_feat, skip_feat, p_c1):
    """concat(up, skip) -> 1x1 ConvLayer, without materializing the concat.

    The c1 weight is split along K; the second pass accumulates the first pass's
    partial sum (pre-activation) inside the kernel epilogue.
    """
    B, H, W, c_up = up_feat.shape
    M = B * H * W
    wm = p_c1["wm"]                                        # (c_up + c_skip, Cout)
    up2 = up_feat.reshape(M, c_up).astype(jnp.bfloat16)
    sk2 = skip_feat.reshape(M, -1).astype(jnp.bfloat16)
    part = fused_matmul(up2, wm[:c_up], p_c1["b"], None,
                        slope=1.0, out_dtype=jnp.float32)   # no activation yet
    y = fused_matmul(sk2, wm[c_up:], jnp.zeros_like(p_c1["b"]), part,
                     slope=0.1, out_dtype=jnp.bfloat16, residual_pre_act=True)
    return y.reshape(B, H, W, -1)


# ------------------------------- parameters -----------------------------------
def _fold_conv_layer(raw):
    """Fold BN (running stats) into the conv weight; keep bias in f32."""
    w = raw["w"]                                            # (k,k,Cin,Cout)
    scale = raw["gamma"] / jnp.sqrt(raw["var"] + BN_EPS)    # (Cout,)
    bias = raw["beta"] - raw["mean"] * scale
    wm = (w * scale).reshape(-1, w.shape[-1]).astype(jnp.bfloat16)
    return {"wm": wm, "b": bias.astype(jnp.float32), "k": int(w.shape[0])}


def _fold_conv_bias(raw):
    w, b = raw["w"], raw["b"]
    return {"wm": w.reshape(-1, w.shape[-1]).astype(jnp.bfloat16),
            "b": b.astype(jnp.float32), "k": int(w.shape[0])}


class ParamGen:
    def __init__(self, seed=0):
        self.key = jax.random.PRNGKey(seed)
        self.count = 0

    def _next_key(self):
        self.count += 1
        return jax.random.fold_in(self.key, self.count)

    def conv_layer(self, cin, cout, k):
        fan_in = cin * k * k
        w = jax.random.normal(self._next_key(), (k, k, cin, cout),
                              jnp.float32) * (0.5 / math.sqrt(fan_in))
        return _fold_conv_layer({"w": w,
                                 "gamma": jnp.ones((cout,), jnp.float32),
                                 "beta": jnp.zeros((cout,), jnp.float32),
                                 "mean": jnp.zeros((cout,), jnp.float32),
                                 "var": jnp.ones((cout,), jnp.float32)})

    def conv_bias_layer(self, cin, cout, k):
        fan_in = cin * k * k
        w = jax.random.normal(self._next_key(), (k, k, cin, cout),
                              jnp.float32) * (0.1 / math.sqrt(fan_in))
        return _fold_conv_bias({"w": w, "b": jnp.zeros((cout,), jnp.float32)})


def build_params(seed=0):
    pg = ParamGen(seed)
    cl = pg.conv_layer

    def res(d):
        return {"c1": cl(d, d // 2, 1), "c2": cl(d // 2, d, 3)}

    def block(cin, cout, rep):
        return {"down": cl(cin, cout, 3), "res": [res(cout) for _ in range(rep)]}

    backbone = {
        "conv1": cl(3, 32, 3),
        "block1": block(32, 64, 1),
        "block2": block(64, 128, 2),
        "block3": block(128, 256, 8),
        "block4": block(256, 512, 8),
        "block5": block(512, 1024, 4),
    }

    def det(cin, cout):
        h = cout // 2
        return {"c1": cl(cin, h, 1), "c2": cl(h, cout, 3),
                "c3": cl(cout, h, 1), "c4": cl(h, cout, 3),
                "c5": cl(cout, h, 1), "c6": cl(h, cout, 3),
                "c7": pg.conv_bias_layer(cout, LAST_LAYER_DIM, 1)}

    tail = {
        "detect1": det(1024, 1024),
        "conv1": cl(512, 256, 1),
        "detect2": det(768, 512),
        "conv2": cl(256, 128, 1),
        "detect3": det(384, 256),
    }
    return {"backbone": backbone, "tail": tail}


# ------------------------------ model forward ---------------------------------
def res_block_fwd(x, p):
    h = conv_layer_fwd(x, p["c1"])
    return conv_layer_fwd(h, p["c2"], residual=x)       # fused post-act residual


def block_fwd(x, p):
    x = conv_layer_fwd(x, p["down"], stride=2)
    for rp in p["res"]:
        x = res_block_fwd(x, rp)
    return x


def yolo_decode(x, anchors, stride):
    """YOLOLayer inference branch; x is NHWC (B, g, g, 255), f32."""
    B, g, _, _ = x.shape
    # NHWC channel index c = anchor*85 + attrib (same split as the NCHW torch view)
    pred = x.reshape(B, g, g, NUM_ANCHORS_PER_SCALE, NUM_ATTRIB)
    pred = jnp.transpose(pred, (0, 3, 1, 2, 4))          # (B, 3, g, g, 85)

    grid = jnp.arange(g, dtype=jnp.float32)
    grid_x = jnp.broadcast_to(grid.reshape(1, 1, 1, g), (1, 1, g, g))
    grid_y = jnp.broadcast_to(grid.reshape(1, 1, g, 1), (1, 1, g, g))
    anchor_w = anchors[:, 0].reshape(1, -1, 1, 1)
    anchor_h = anchors[:, 1].reshape(1, -1, 1, 1)

    xc = (jax.nn.sigmoid(pred[..., 0]) + grid_x) * stride
    yc = (jax.nn.sigmoid(pred[..., 1]) + grid_y) * stride
    wp = jnp.exp(pred[..., 2]) * anchor_w
    hp = jnp.exp(pred[..., 3]) * anchor_h
    bbox = jnp.stack((xc, yc, wp, hp), axis=4).reshape(B, -1, 4)
    conf = jax.nn.sigmoid(pred[..., 4]).reshape(B, -1, 1)
    cls = jax.nn.sigmoid(pred[..., 5:]).reshape(B, -1, NUM_CLASSES)
    return jnp.concatenate((bbox, conf, cls), axis=-1)


def detection_block_tail(x_c1, p, anchors, stride):
    """DetectionBlock after its first 1x1 conv (c1 is handled by the caller)."""
    x = conv_layer_fwd(x_c1, p["c2"])
    x = conv_layer_fwd(x, p["c3"])
    x = conv_layer_fwd(x, p["c4"])
    branch = conv_layer_fwd(x, p["c5"])
    x = conv_layer_fwd(branch, p["c6"])
    # Biased 1x1 head: no BN/activation; keep f32 for the sigmoid/exp decode.
    x = conv_layer_fwd(x, p["c7"], slope=1.0, out_dtype=jnp.float32)
    return yolo_decode(x, anchors, stride), branch


def upsample2(x):
    return jnp.repeat(jnp.repeat(x, 2, axis=1), 2, axis=2)   # nearest, NHWC


def yolov3_forward(params, x_nchw):
    x = jnp.transpose(x_nchw, (0, 2, 3, 1)).astype(jnp.bfloat16)   # NCHW -> NHWC
    bb = params["backbone"]
    x = conv_layer_fwd(x, bb["conv1"])
    x = block_fwd(x, bb["block1"])
    x = block_fwd(x, bb["block2"])
    out3 = block_fwd(x, bb["block3"])
    out2 = block_fwd(out3, bb["block4"])
    out1 = block_fwd(out2, bb["block5"])

    t = params["tail"]
    anchors = jnp.array(ANCHORS, dtype=jnp.float32)

    x1 = conv_layer_fwd(out1, t["detect1"]["c1"])
    o1, branch1 = detection_block_tail(x1, t["detect1"], anchors[6:9], 32)

    tmp = upsample2(conv_layer_fwd(branch1, t["conv1"]))
    x2 = route_conv1(tmp, out2, t["detect2"]["c1"])         # fused concat + 1x1
    o2, branch2 = detection_block_tail(x2, t["detect2"], anchors[3:6], 16)

    tmp = upsample2(conv_layer_fwd(branch2, t["conv2"]))
    x3 = route_conv1(tmp, out3, t["detect3"]["c1"])          # fused concat + 1x1
    o3, _ = detection_block_tail(x3, t["detect3"], anchors[0:3], 8)

    return jnp.concatenate((o1, o2, o3), axis=1)


# ----------------------------------- main --------------------------------------
if __name__ == "__main__":
    params = build_params(seed=0)
    key = jax.random.PRNGKey(0)
    # Smallest spatial size compatible with 5x stride-2 downsampling: 32x32.
    x = jax.random.normal(key, (2, 3, 32, 32), dtype=jnp.float32)

    out = yolov3_forward(params, x)
    out = jax.block_until_ready(out)

    expected_boxes = NUM_ANCHORS_PER_SCALE * (1 * 1 + 2 * 2 + 4 * 4)   # 63
    assert out.shape == (2, expected_boxes, NUM_ATTRIB), out.shape
    assert bool(jnp.all(jnp.isfinite(out)))
    print("KERNEL_OK")
</pallas_src>

<mosaic_0001>
module attributes {stable_mosaic.version = 11 : i64} {
  func.func @_fused_matmul_kernel(%arg0: i32, %arg1: i32, %arg2: i32, %arg3: memref<512x32xbf16, #tpu.memory_space<vmem>>, %arg4: memref<32x128xbf16, #tpu.memory_space<vmem>>, %arg5: memref<1x128xf32, #tpu.memory_space<vmem>>, %arg6: memref<512x128xbf16, #tpu.memory_space<vmem>>, %arg7: memref<512x128xf32, #tpu.memory_space<vmem>>) attributes {dimension_semantics = [#tpu.dimension_semantics<parallel>, #tpu.dimension_semantics<parallel>, #tpu.dimension_semantics<arbitrary>], iteration_bounds = array<i64: 4, 1, 1>, scalar_prefetch = 0 : i64, scratch_operands = 1 : i64, tpu.core_type = #tpu.core_type<tc>, window_params = [{transform_indices = @transform_0, window_bounds = array<i64: 512, 32>}, {transform_indices = @transform_1, window_bounds = array<i64: 32, 128>}, {transform_indices = @transform_2, window_bounds = array<i64: 1, 128>}, {transform_indices = @transform_3, window_bounds = array<i64: 512, 128>}]} {
    %c0_i32 = arith.constant 0 : i32
    %0 = arith.cmpi eq, %arg2, %c0_i32 : i32
    %1 = arith.extui %0 : i1 to i32
    %c0_i32_0 = arith.constant 0 : i32
    %2 = arith.cmpi ne, %1, %c0_i32_0 : i32
    scf.if %2 {
      %cst_10 = arith.constant 0.000000e+00 : f32
      %12 = vector.broadcast %cst_10 : f32 to vector<512x128xf32>
      %c0_11 = arith.constant 0 : index
      %c0_12 = arith.constant 0 : index
      %13 = vector.load %arg7[%c0_11, %c0_12] : memref<512x128xf32, #tpu.memory_space<vmem>>, vector<512x128xf32>
      tpu.vector_store %arg7[%c0_11, %c0_12], %12 {strides = array<i32>} : memref<512x128xf32, #tpu.memory_space<vmem>>, vector<512x128xf32>,
    } else {
    }
    %c0 = arith.constant 0 : index
    %c0_1 = arith.constant 0 : index
    %3 = vector.load %arg7[%c0, %c0_1] : memref<512x128xf32, #tpu.memory_space<vmem>>, vector<512x128xf32>
    %c0_2 = arith.constant 0 : index
    %c0_3 = arith.constant 0 : index
    %4 = vector.load %arg3[%c0_2, %c0_3] : memref<512x32xbf16, #tpu.memory_space<vmem>>, vector<512x32xbf16>
    %c0_4 = arith.constant 0 : index
    %c0_5 = arith.constant 0 : index
    %5 = vector.load %arg4[%c0_4, %c0_5] : memref<32x128xbf16, #tpu.memory_space<vmem>>, vector<32x128xbf16>
    %cst = arith.constant dense<0.000000e+00> : vector<512x128xf32>
    %6 = tpu.matmul %4, %5, %cst {dimension_numbers = #tpu.dot_dimension_numbers<[1], [0], [0], [1], [0, 0, 1, 1], [], []>} : vector<512x32xbf16>, vector<32x128xbf16>, vector<512x128xf32> -> vector<512x128xf32>
    %7 = arith.addf %3, %6 : vector<512x128xf32>
    %c0_6 = arith.constant 0 : index
    %c0_7 = arith.constant 0 : index
    %8 = vector.load %arg7[%c0_6, %c0_7] : memref<512x128xf32, #tpu.memory_space<vmem>>, vector<512x128xf32>
    tpu.vector_store %arg7[%c0_6, %c0_7], %7 {strides = array<i32>} : memref<512x128xf32, #tpu.memory_space<vmem>>, vector<512x128xf32>,
    %c0_i32_8 = arith.constant 0 : i32
    %9 = arith.cmpi eq, %arg2, %c0_i32_8 : i32
    %10 = arith.extui %9 : i1 to i32
    %c0_i32_9 = arith.constant 0 : i32
    %11 = arith.cmpi ne, %10, %c0_i32_9 : i32
    scf.if %11 {
      %c0_10 = arith.constant 0 : index
      %c0_11 = arith.constant 0 : index
      %12 = vector.load %arg7[%c0_10, %c0_11] : memref<512x128xf32, #tpu.memory_space<vmem>>, vector<512x128xf32>
      %c0_12 = arith.constant 0 : index
      %c0_13 = arith.constant 0 : index
      %13 = vector.load %arg5[%c0_12, %c0_13] : memref<1x128xf32, #tpu.memory_space<vmem>>, vector<1x128xf32>
      %14 = vector.broadcast %13 : vector<1x128xf32> to vector<512x128xf32>
      %15 = arith.addf %12, %14 : vector<512x128xf32>
      %cst_14 = arith.constant 0.000000e+00 : f32
      %16 = vector.broadcast %cst_14 : f32 to vector<512x128xf32>
      %17 = arith.cmpf oge, %15, %16 : vector<512x128xf32>
      %cst_15 = arith.constant 1.000000e-01 : f32
      %18 = vector.broadcast %cst_15 : f32 to vector<512x128xf32>
      %19 = arith.mulf %15, %18 : vector<512x128xf32>
      %20 = arith.select %17, %15, %19 : vector<512x128xi1>, vector<512x128xf32>
      %21 = arith.truncf %20 : vector<512x128xf32> to vector<512x128xbf16>
      %c0_16 = arith.constant 0 : index
      %c0_17 = arith.constant 0 : index
      %22 = vector.load %arg6[%c0_16, %c0_17] : memref<512x128xbf16, #tpu.memory_space<vmem>>, vector<512x128xbf16>
      tpu.vector_store %arg6[%c0_16, %c0_17], %21 {strides = array<i32>} : memref<512x128xbf16, #tpu.memory_space<vmem>>, vector<512x128xbf16>,
    } else {
    }
    return
  }
  func.func @transform_0(%arg0: i32, %arg1: i32, %arg2: i32) -> (i32, i32) {
    %c0_i32 = arith.constant 0 : i32
    return %arg0, %arg2 : i32, i32
  }
  func.func @transform_1(%arg0: i32, %arg1: i32, %arg2: i32) -> (i32, i32) {
    %c0_i32 = arith.constant 0 : i32
    return %arg2, %arg1 : i32, i32
  }
  func.func @transform_2(%arg0: i32, %arg1: i32, %arg2: i32) -> (i32, i32) {
    %c0_i32 = arith.constant 0 : i32
    %c0_i32_0 = arith.constant 0 : i32
    return %c0_i32, %arg1 : i32, i32
  }
  func.func @transform_3(%arg0: i32, %arg1: i32, %arg2: i32) -> (i32, i32) {
    %c0_i32 = arith.constant 0 : i32
    return %arg0, %arg1 : i32, i32
  }
}

</mosaic_0001>

<llo_original>
// kernel: fused_matmul.1
$region0: #{fused_matmul.1}
  #allocation0 [shape = 'u32[]', space=smem, size = 0x4, offset = 0x4, fixed_abs, tag = 'smem constant byte address 0x4 - core index']
  #allocation1 [shape = 'u32[144,128]{1,0:T(1,128)}', space=vmem, size = 0x12000, scoped, tag = 'internal scratch']
  #allocation2 [shape = 'f32[512,128]{1,0:T(8,128)}', space=vmem, size = 0x40000, scoped, tag = 'scratch operand']
  %s0 = inlined_call_operand.vmem [shape: bf16[2048,32], index: 0, kind: input, shape index: {}]
  %s1 = inlined_call_operand.vmem [shape: bf16[32,128], index: 1, kind: input, shape index: {}]
  %s2 = inlined_call_operand.vmem [shape: f32[1,128], index: 2, kind: input, shape index: {}]
  %s3 = inlined_call_operand.vmem [shape: bf16[2048,128], index: 3, kind: output, shape index: {}]
  %s4 = sld [smem:[#allocation0]]
  $region53: #{fused_matmul.1} parent=0
    _
  %s6 = ssub.s32 1, %s4
  %s7 = scalar_select 0, %s6, %s4
  loop: start=0, step=1, limit=6
  $region2: #{fused_matmul.1} parent=0 // loop_pre_header
    _
  $region3: #{fused_matmul.1} parent=0 // loop_header
    %s9 = sphi 0, %s13
    %p10 = scmp.ge.s32.totalorder %s9, 6
    %s16 = sphi 0, %s35
    %s17 = sphi 0, %s31
    %s18 = sphi 0, %s27
    %s19 = sphi 0, %s16
    %s20 = sphi 0, %s17
    %s21 = sphi 0, %s18
    %s22 = sphi 0, %s19
    %s23 = sphi 0, %s20
    %s24 = sphi 0, %s21
    %s40 = sphi 0, %s42
    %s43 = sphi 0, %s40
    %s44 = sphi 0, %s43
    %s60 = sphi 0, %s44
    %s68 = sphi 0, %s70
    %s71 = sphi 0, %s68
    %s72 = sphi 0, %s71
    %s88 = sphi 0, %s72
    %s94 = sphi 0, %s96
    %s97 = sphi 0, %s94
    %s98 = sphi 0, %s97
    %s114 = sphi 0, %s98
    %s122 = sphi 0, %s124
    %s125 = sphi 0, %s122
    %s126 = sphi 0, %s125
    %s142 = sphi 0, %s126
  $region4: #{fused_matmul.1} parent=0 // loop_header_branch
    %12 = sbr.rel (%p10) target = $region8
  $region5: #{fused_matmul.1} parent=0 // loop_body
    %s14 = ssub.s32 %s9, 1
    %s15 = ssub.s32 %s9, 2
    %s25 = sadd.s32 1, %s18
    %p26 = scmp.ge.s32.totalorder %s25, 1
    %s27 = scalar_select %p26, 0, %s25
    %s28 = sadd.s32 1, %s17
    %s29 = scalar_select %p26, %s28, %s17
    %p30 = scmp.ge.s32.totalorder %s29, 1
    %s31 = scalar_select %p30, 0, %s29
    %s32 = sadd.s32 1, %s16
    %s33 = scalar_select %p30, %s32, %s16
    %p34 = scmp.ge.s32.totalorder %s33, 4
    %s35 = scalar_select %p34, 0, %s33
    %s36 = ssub.s32 %s16, %s35
    %s37 = ssub.s32 %s18, %s27
    %s38 = sor.u32 %s36, %s37
    %p39 = scmp.eq.s32.totalorder %s38, 0
    %s41 = sadd.s32 %s40, 1
    %s42 = scalar_select %p39, %s40, %s41
    %p45 = pneg %p39
    %p46 = scmp.eq.s32.totalorder %s9, 3
    %p47 = por %p45, %p46
    %p48 = scmp.ne.s32.totalorder %s40, %s43
    %p49 = scmp.eq.s32.totalorder %s9, 0
    %p50 = por %p48, %p49
    %p51 = scmp.ne.s32.totalorder %s40, %s43
    %p52 = scmp.eq.s32.totalorder %s14, 3
    %p53 = por %p51, %p52
    %p54 = scmp.ne.s32.totalorder %s43, %s44
    %p55 = scmp.eq.s32.totalorder %s14, 0
    %p56 = por %p54, %p55
    %p57 = scmp.ne.s32.totalorder %s43, %s44
    %p58 = scmp.eq.s32.totalorder %s15, 3
    %p59 = por %p57, %p58
    %p61 = scmp.ne.s32.totalorder %s44, %s60
    %p62 = scmp.eq.s32.totalorder %s15, 0
    %p63 = por %p61, %p62
    %s64 = ssub.s32 %s18, %s27
    %s65 = ssub.s32 %s17, %s31
    %s66 = sor.u32 %s64, %s65
    %p67 = scmp.eq.s32.totalorder %s66, 0
    %s69 = sadd.s32 %s68, 1
    %s70 = scalar_select %p67, %s68, %s69
    %p73 = pneg %p67
    %p74 = scmp.eq.s32.totalorder %s9, 3
    %p75 = por %p73, %p74
    %p76 = scmp.ne.s32.totalorder %s68, %s71
    %p77 = scmp.eq.s32.totalorder %s9, 0
    %p78 = por %p76, %p77
    %p79 = scmp.ne.s32.totalorder %s68, %s71
    %p80 = scmp.eq.s32.totalorder %s14, 3
    %p81 = por %p79, %p80
    %p82 = scmp.ne.s32.totalorder %s71, %s72
    %p83 = scmp.eq.s32.totalorder %s14, 0
    %p84 = por %p82, %p83
    %p85 = scmp.ne.s32.totalorder %s71, %s72
    %p86 = scmp.eq.s32.totalorder %s15, 3
    %p87 = por %p85, %p86
    %p89 = scmp.ne.s32.totalorder %s72, %s88
    %p90 = scmp.eq.s32.totalorder %s15, 0
    %p91 = por %p89, %p90
    %s92 = ssub.s32 %s17, %s31
    %p93 = scmp.eq.s32.totalorder %s92, 0
    %s95 = sadd.s32 %s94, 1
    %s96 = scalar_select %p93, %s94, %s95
    %p99 = pneg %p93
    %p100 = scmp.eq.s32.totalorder %s9, 3
    %p101 = por %p99, %p100
    %p102 = scmp.ne.s32.totalorder %s94, %s97
    %p103 = scmp.eq.s32.totalorder %s9, 0
    %p104 = por %p102, %p103
    %p105 = scmp.ne.s32.totalorder %s94, %s97
    %p106 = scmp.eq.s32.totalorder %s14, 3
    %p107 = por %p105, %p106
    %p108 = scmp.ne.s32.totalorder %s97, %s98
    %p109 = scmp.eq.s32.totalorder %s14, 0
    %p110 = por %p108, %p109
    %p111 = scmp.ne.s32.totalorder %s97, %s98
    %p112 = scmp.eq.s32.totalorder %s15, 3
    %p113 = por %p111, %p112
    %p115 = scmp.ne.s32.totalorder %s98, %s114
    %p116 = scmp.eq.s32.totalorder %s15, 0
    %p117 = por %p115, %p116
    %s118 = ssub.s32 %s16, %s35
    %s119 = ssub.s32 %s17, %s31
    %s120 = sor.u32 %s118, %s119
    %p121 = scmp.eq.s32.totalorder %s120, 0
    %s123 = sadd.s32 %s122, 1
    %s124 = scalar_select %p121, %s122, %s123
    %p127 = pneg %p121
    %p128 = scmp.eq.s32.totalorder %s9, 3
    %p129 = por %p127, %p128
    %p130 = scmp.ne.s32.totalorder %s122, %s125
    %p131 = scmp.eq.s32.totalorder %s9, 0
    %p132 = por %p130, %p131
    %p133 = scmp.ne.s32.totalorder %s122, %s125
    %p134 = scmp.eq.s32.totalorder %s14, 3
    %p135 = por %p133, %p134
    %p136 = scmp.ne.s32.totalorder %s125, %s126
    %p137 = scmp.eq.s32.totalorder %s14, 0
    %p138 = por %p136, %p137
    %p139 = scmp.ne.s32.totalorder %s125, %s126
    %p140 = scmp.eq.s32.totalorder %s15, 3
    %p141 = por %p139, %p140
    %p143 = scmp.ne.s32.totalorder %s126, %s142
    %p144 = scmp.eq.s32.totalorder %s15, 0
    %p145 = por %p143, %p144
    %p146 = scmp.le.s32.totalorder 1, %s9
    %p147 = scmp.lt.s32.totalorder %s9, 5
    %p148 = pnand %p146, %p147
    %p149 = pneg %p148
    // Predicated region
    $region9: #{fused_matmul.1} parent=5 // pred_check
      _
    $region10: #{fused_matmul.1} parent=5 // pred_check_branch
      %151 = sbr.rel (%p148) target = $region12
    $region11: #{fused_matmul.1} parent=5 // pred_region
      %s152 = ssub.s32 %s9, 1
      // Predicated region
      $region13: #{fused_matmul.1} parent=11 // pred_check
        %p153 = pneg %p84
      $region14: #{fused_matmul.1} parent=11 // pred_check_branch
        %155 = sbr.rel (%p153) target = $region16
      $region15: #{fused_matmul.1} parent=11 // pred_region
        %s156 = smul.u32 4, %s21
        %p157 = scmp.lt.s32.totalorder %s156, 3
        %s158 = scalar_select %p157, %s156, 3
        %p159 = scmp.lt.s32.totalorder %s20, 0
        %s160 = scalar_select %p159, %s20, 0
        %s161 = sadd.s32 %s160, %s158
        %s162 = smul.addr %s161, 4
        %s163 = scalar_lea.vmem %s1, %s162
        %s164 = smul.u32 4, %s21
      $region16: #{fused_matmul.1} parent=11 // pred_fallthru
        _
      // Predicated region
      $region17: #{fused_matmul.1} parent=11 // pred_check
        %p165 = pneg %p110
      $region18: #{fused_matmul.1} parent=11 // pred_check_branch
        %167 = sbr.rel (%p165) target = $region20
      $region19: #{fused_matmul.1} parent=11 // pred_region
        %p168 = scmp.lt.s32.totalorder %s20, 0
        %s169 = scalar_select %p168, %s20, 0
        %s170 = scalar_lea.vmem %s2, %s169
      $region20: #{fused_matmul.1} parent=11 // pred_fallthru
        _
    $region12: #{fused_matmul.1} parent=5 // pred_fallthru
      _
    %p171 = scmp.lt.s32.totalorder %s9, 4
    // Predicated region
    $region21: #{fused_matmul.1} parent=5 // pred_check
      %p172 = pneg %p171
    $region22: #{fused_matmul.1} parent=5 // pred_check_branch
      %174 = sbr.rel (%p172) target = $region24
    $region23: #{fused_matmul.1} parent=5 // pred_region
      // Predicated region
      $region25: #{fused_matmul.1} parent=23 // pred_check
        %p175 = pneg %p50
      $region26: #{fused_matmul.1} parent=23 // pred_check_branch
        %177 = sbr.rel (%p175) target = $region28
      $region27: #{fused_matmul.1} parent=23 // pred_region
        %s178 = smul.u32 64, %s16
        %p179 = scmp.lt.s32.totalorder %s178, 255
        %s180 = scalar_select %p179, %s178, 255
        %p181 = scmp.lt.s32.totalorder %s18, 0
        %s182 = scalar_select %p181, %s18, 0
        %s183 = sadd.s32 %s182, %s180
        %s184 = smul.addr %s183, 4
        %s185 = scalar_lea.vmem %s0, %s184
        %s186 = smul.u32 64, %s16
      $region28: #{fused_matmul.1} parent=23 // pred_fallthru
        _
    $region24: #{fused_matmul.1} parent=5 // pred_fallthru
      _
    %p187 = scmp.le.s32.totalorder 1, %s9
    %p188 = scmp.lt.s32.totalorder %s9, 5
    %p189 = pnand %p187, %p188
    %p190 = pneg %p189
    // Predicated region
    $region29: #{fused_matmul.1} parent=5 // pred_check
      _
    $region30: #{fused_matmul.1} parent=5 // pred_check_branch
      %192 = sbr.rel (%p189) target = $region32
    $region31: #{fused_matmul.1} parent=5 // pred_region
      %s193 = ssub.s32 %s9, 1
      %s194 = smul.u32 64, %s19
      %p195 = scmp.lt.s32.totalorder %s194, 255
      %s196 = scalar_select %p195, %s194, 255
      %p197 = scmp.lt.s32.totalorder %s21, 0
      %s198 = scalar_select %p197, %s21, 0
      %s199 = sadd.s32 %s198, %s196
      %s200 = smul.addr %s199, 4
      %s201 = scalar_lea.vmem %s0, %s200
      %p202 = pneg %p56
      %p203 = pneg %p53
      %s204 = smul.u32 4, %s21
      %p205 = scmp.lt.s32.totalorder %s204, 3
      %s206 = scalar_select %p205, %s204, 3
      %p207 = scmp.lt.s32.totalorder %s20, 0
      %s208 = scalar_select %p207, %s20, 0
      %s209 = sadd.s32 %s208, %s206
      %s210 = smul.addr %s209, 4
      %s211 = scalar_lea.vmem %s1, %s210
      %p212 = pneg %p84
      %p213 = pneg %p81
      %p214 = scmp.lt.s32.totalorder %s20, 0
      %s215 = scalar_select %p214, %s20, 0
      %s216 = scalar_lea.vmem %s2, %s215
      %p217 = pneg %p110
      %p218 = pneg %p107
      %p219 = pneg %p138
      %p220 = pneg %p135
      %s221 = smul.u32 64, %s19
      %p222 = scmp.lt.s32.totalorder %s221, 255
      %s223 = scalar_select %p222, %s221, 255
      %p224 = scmp.lt.s32.totalorder %s20, 0
      %s225 = scalar_select %p224, %s20, 0
      %s226 = sadd.s32 %s225, %s223
      %s227 = smul.addr %s226, 4
      %s228 = scalar_lea.vmem %s3, %s227
      %s229 = smul.u32 64, %s19
      %p230 = scmp.lt.s32.totalorder %s229, 255
      %s231 = scalar_select %p230, %s229, 255
      %p232 = scmp.lt.s32.totalorder %s21, 0
      %s233 = scalar_select %p232, %s21, 0
      %s234 = sadd.s32 %s233, %s231
      %s235 = smul.addr %s234, 4
      %s236 = scalar_lea.vmem %s0, %s235
      %s237 = smul.u32 64, %s19
      %s238 = smul.u32 4, %s21
      %p239 = scmp.lt.s32.totalorder %s238, 3
      %s240 = scalar_select %p239, %s238, 3
      %p241 = scmp.lt.s32.totalorder %s20, 0
      %s242 = scalar_select %p241, %s20, 0
      %s243 = sadd.s32 %s242, %s240
      %s244 = smul.addr %s243, 4
      %s245 = scalar_lea.vmem %s1, %s244
      %s246 = smul.u32 4, %s21
      %p247 = scmp.lt.s32.totalorder %s20, 0
      %s248 = scalar_select %p247, %s20, 0
      %s249 = scalar_lea.vmem %s2, %s248
      %s250 = smul.u32 64, %s19
      %p251 = scmp.lt.s32.totalorder %s250, 255
      %s252 = scalar_select %p251, %s250, 255
      %p253 = scmp.lt.s32.totalorder %s20, 0
      %s254 = scalar_select %p253, %s20, 0
      %s255 = sadd.s32 %s254, %s252
      %s256 = smul.addr %s255, 4
      %s257 = scalar_lea.vmem %s3, %s256
      %s258 = smul.u32 64, %s19
      %p260 = scmp.eq.s32.totalorder %s21, 0
      // Predicated region
      $region33: #{fused_matmul.1} parent=31 // pred_check
        %p261 = pneg %p260
      $region34: #{fused_matmul.1} parent=31 // pred_check_branch
        %263 = sbr.rel (%p261) target = $region36
      $region35: #{fused_matmul.1} parent=31 // pred_region
        %264 = vst [vmem:[#allocation2] sm:$0xff] 0.0
        %265 = vst [vmem:[#allocation2 + $0x8] sm:$0xff] 0.0
        %266 = vst [vmem:[#allocation2 + $0x10] sm:$0xff] 0.0
        %267 = vst [vmem:[#allocation2 + $0x18] sm:$0xff] 0.0
        %268 = vst [vmem:[#allocation2 + $0x20] sm:$0xff] 0.0
        %269 = vst [vmem:[#allocation2 + $0x28] sm:$0xff] 0.0
        %270 = vst [vmem:[#allocation2 + $0x30] sm:$0xff] 0.0
        %271 = vst [vmem:[#allocation2 + $0x38] sm:$0xff] 0.0
        %272 = vst [vmem:[#allocation2 + $0x40] sm:$0xff] 0.0
        %273 = vst [vmem:[#allocation2 + $0x48] sm:$0xff] 0.0
        %274 = vst [vmem:[#allocation2 + $0x50] sm:$0xff] 0.0
        %275 = vst [vmem:[#allocation2 + $0x58] sm:$0xff] 0.0
        %276 = vst [vmem:[#allocation2 + $0x60] sm:$0xff] 0.0
        %277 = vst [vmem:[#allocation2 + $0x68] sm:$0xff] 0.0
        %278 = vst [vmem:[#allocation2 + $0x70] sm:$0xff] 0.0
        %279 = vst [vmem:[#allocation2 + $0x78] sm:$0xff] 0.0
        %280 = vst [vmem:[#allocation2 + $0x80] sm:$0xff] 0.0
        %281 = vst [vmem:[#allocation2 + $0x88] sm:$0xff] 0.0
        %282 = vst [vmem:[#allocation2 + $0x90] sm:$0xff] 0.0
        %283 = vst [vmem:[#allocation2 + $0x98] sm:$0xff] 0.0
        %284 = vst [vmem:[#allocation2 + $0xa0] sm:$0xff] 0.0
        %285 = vst [vmem:[#allocation2 + $0xa8] sm:$0xff] 0.0
        %286 = vst [vmem:[#allocation2 + $0xb0] sm:$0xff] 0.0
        %287 = vst [vmem:[#allocation2 + $0xb8] sm:$0xff] 0.0
        %288 = vst [vmem:[#allocation2 + $0xc0] sm:$0xff] 0.0
        %289 = vst [vmem:[#allocation2 + $0xc8] sm:$0xff] 0.0
        %290 = vst [vmem:[#allocation2 + $0xd0] sm:$0xff] 0.0
        %291 = vst [vmem:[#allocation2 + $0xd8] sm:$0xff] 0.0
        %292 = vst [vmem:[#allocation2 + $0xe0] sm:$0xff] 0.0
        %293 = vst [vmem:[#allocation2 + $0xe8] sm:$0xff] 0.0
        %294 = vst [vmem:[#allocation2 + $0xf0] sm:$0xff] 0.0
        %295 = vst [vmem:[#allocation2 + $0xf8] sm:$0xff] 0.0
        %296 = vst [vmem:[#allocation2 + $0x100] sm:$0xff] 0.0
        %297 = vst [vmem:[#allocation2 + $0x108] sm:$0xff] 0.0
        %298 = vst [vmem:[#allocation2 + $0x110] sm:$0xff] 0.0
        %299 = vst [vmem:[#allocation2 + $0x118] sm:$0xff] 0.0
        %300 = vst [vmem:[#allocation2 + $0x120] sm:$0xff] 0.0
        %301 = vst [vmem:[#allocation2 + $0x128] sm:$0xff] 0.0
        %302 = vst [vmem:[#allocation2 + $0x130] sm:$0xff] 0.0
        %303 = vst [vmem:[#allocation2 + $0x138] sm:$0xff] 0.0
        %304 = vst [vmem:[#allocation2 + $0x140] sm:$0xff] 0.0
        %305 = vst [vmem:[#allocation2 + $0x148] sm:$0xff] 0.0
        %306 = vst [vmem:[#allocation2 + $0x150] sm:$0xff] 0.0
        %307 = vst [vmem:[#allocation2 + $0x158] sm:$0xff] 0.0
        %308 = vst [vmem:[#allocation2 + $0x160] sm:$0xff] 0.0
        %309 = vst [vmem:[#allocation2 + $0x168] sm:$0xff] 0.0
        %310 = vst [vmem:[#allocation2 + $0x170] sm:$0xff] 0.0
        %311 = vst [vmem:[#allocation2 + $0x178] sm:$0xff] 0.0
        %312 = vst [vmem:[#allocation2 + $0x180] sm:$0xff] 0.0
        %313 = vst [vmem:[#allocation2 + $0x188] sm:$0xff] 0.0
        %314 = vst [vmem:[#allocation2 + $0x190] sm:$0xff] 0.0
        %315 = vst [vmem:[#allocation2 + $0x198] sm:$0xff] 0.0
        %316 = vst [vmem:[#allocation2 + $0x1a0] sm:$0xff] 0.0
        %317 = vst [vmem:[#allocation2 + $0x1a8] sm:$0xff] 0.0
        %318 = vst [vmem:[#allocation2 + $0x1b0] sm:$0xff] 0.0
        %319 = vst [vmem:[#allocation2 + $0x1b8] sm:$0xff] 0.0
        %320 = vst [vmem:[#allocation2 + $0x1c0] sm:$0xff] 0.0
        %321 = vst [vmem:[#allocation2 + $0x1c8] sm:$0xff] 0.0
        %322 = vst [vmem:[#allocation2 + $0x1d0] sm:$0xff] 0.0
        %323 = vst [vmem:[#allocation2 + $0x1d8] sm:$0xff] 0.0
        %324 = vst [vmem:[#allocation2 + $0x1e0] sm:$0xff] 0.0
        %325 = vst [vmem:[#allocation2 + $0x1e8] sm:$0xff] 0.0
        %326 = vst [vmem:[#allocation2 + $0x1f0] sm:$0xff] 0.0
        %327 = vst [vmem:[#allocation2 + $0x1f8] sm:$0xff] 0.0
      $region36: #{fused_matmul.1} parent=31 // pred_fallthru
        _
      %v328 = vld [vmem:[#allocation2] sm:$0xff]
      %v329 = vld [vmem:[#allocation2 + $0x8] sm:$0xff]
      %v330 = vld [vmem:[#allocation2 + $0x10] sm:$0xff]
      %v331 = vld [vmem:[#allocation2 + $0x18] sm:$0xff]
      %v332 = vld [vmem:[#allocation2 + $0x20] sm:$0xff]
      %v333 = vld [vmem:[#allocation2 + $0x28] sm:$0xff]
      %v334 = vld [vmem:[#allocation2 + $0x30] sm:$0xff]
      %v335 = vld [vmem:[#allocation2 + $0x38] sm:$0xff]
      %v336 = vld [vmem:[#allocation2 + $0x40] sm:$0xff]
      %v337 = vld [vmem:[#allocation2 + $0x48] sm:$0xff]
      %v338 = vld [vmem:[#allocation2 + $0x50] sm:$0xff]
      %v339 = vld [vmem:[#allocation2 + $0x58] sm:$0xff]
      %v340 = vld [vmem:[#allocation2 + $0x60] sm:$0xff]
      %v341 = vld [vmem:[#allocation2 + $0x68] sm:$0xff]
      %v342 = vld [vmem:[#allocation2 + $0x70] sm:$0xff]
      %v343 = vld [vmem:[#allocation2 + $0x78] sm:$0xff]
      %v344 = vld [vmem:[#allocation2 + $0x80] sm:$0xff]
      %v345 = vld [vmem:[#allocation2 + $0x88] sm:$0xff]
      %v346 = vld [vmem:[#allocation2 + $0x90] sm:$0xff]
      %v347 = vld [vmem:[#allocation2 + $0x98] sm:$0xff]
      %v348 = vld [vmem:[#allocation2 + $0xa0] sm:$0xff]
      %v349 = vld [vmem:[#allocation2 + $0xa8] sm:$0xff]
      %v350 = vld [vmem:[#allocation2 + $0xb0] sm:$0xff]
      %v351 = vld [vmem:[#allocation2 + $0xb8] sm:$0xff]
      %v352 = vld [vmem:[#allocation2 + $0xc0] sm:$0xff]
      %v353 = vld [vmem:[#allocation2 + $0xc8] sm:$0xff]
      %v354 = vld [vmem:[#allocation2 + $0xd0] sm:$0xff]
      %v355 = vld [vmem:[#allocation2 + $0xd8] sm:$0xff]
      %v356 = vld [vmem:[#allocation2 + $0xe0] sm:$0xff]
      %v357 = vld [vmem:[#allocation2 + $0xe8] sm:$0xff]
      %v358 = vld [vmem:[#allocation2 + $0xf0] sm:$0xff]
      %v359 = vld [vmem:[#allocation2 + $0xf8] sm:$0xff]
      %v360 = vld [vmem:[#allocation2 + $0x100] sm:$0xff]
      %v361 = vld [vmem:[#allocation2 + $0x108] sm:$0xff]
      %v362 = vld [vmem:[#allocation2 + $0x110] sm:$0xff]
      %v363 = vld [vmem:[#allocation2 + $0x118] sm:$0xff]
      %v364 = vld [vmem:[#allocation2 + $0x120] sm:$0xff]
      %v365 = vld [vmem:[#allocation2 + $0x128] sm:$0xff]
      %v366 = vld [vmem:[#allocation2 + $0x130] sm:$0xff]
      %v367 = vld [vmem:[#allocation2 + $0x138] sm:$0xff]
      %v368 = vld [vmem:[#allocation2 + $0x140] sm:$0xff]
      %v369 = vld [vmem:[#allocation2 + $0x148] sm:$0xff]
      %v370 = vld [vmem:[#allocation2 + $0x150] sm:$0xff]
      %v371 = vld [vmem:[#allocation2 + $0x158] sm:$0xff]
      %v372 = vld [vmem:[#allocation2 + $0x160] sm:$0xff]
      %v373 = vld [vmem:[#allocation2 + $0x168] sm:$0xff]
      %v374 = vld [vmem:[#allocation2 + $0x170] sm:$0xff]
      %v375 = vld [vmem:[#allocation2 + $0x178] sm:$0xff]
      %v376 = vld [vmem:[#allocation2 + $0x180] sm:$0xff]
      %v377 = vld [vmem:[#allocation2 + $0x188] sm:$0xff]
      %v378 = vld [vmem:[#allocation2 + $0x190] sm:$0xff]
      %v379 = vld [vmem:[#allocation2 + $0x198] sm:$0xff]
      %v380 = vld [vmem:[#allocation2 + $0x1a0] sm:$0xff]
      %v381 = vld [vmem:[#allocation2 + $0x1a8] sm:$0xff]
      %v382 = vld [vmem:[#allocation2 + $0x1b0] sm:$0xff]
      %v383 = vld [vmem:[#allocation2 + $0x1b8] sm:$0xff]
      %v384 = vld [vmem:[#allocation2 + $0x1c0] sm:$0xff]
      %v385 = vld [vmem:[#allocation2 + $0x1c8] sm:$0xff]
      %v386 = vld [vmem:[#allocation2 + $0x1d0] sm:$0xff]
      %v387 = vld [vmem:[#allocation2 + $0x1d8] sm:$0xff]
      %v388 = vld [vmem:[#allocation2 + $0x1e0] sm:$0xff]
      %v389 = vld [vmem:[#allocation2 + $0x1e8] sm:$0xff]
      %v390 = vld [vmem:[#allocation2 + $0x1f0] sm:$0xff]
      %v391 = vld [vmem:[#allocation2 + $0x1f8] sm:$0xff]
      %v392 = vld [vmem:[%s236] sm:$0xf]
      %v393 = vld [vmem:[%s236 + $0x4] sm:$0xf]
      %v394 = vld [vmem:[%s236 + $0x8] sm:$0xf]
      %v395 = vld [vmem:[%s236 + $0xc] sm:$0xf]
      %v396 = vld [vmem:[%s236 + $0x10] sm:$0xf]
      %v397 = vld [vmem:[%s236 + $0x14] sm:$0xf]
      %v398 = vld [vmem:[%s236 + $0x18] sm:$0xf]
      %v399 = vld [vmem:[%s236 + $0x1c] sm:$0xf]
      %v400 = vld [vmem:[%s236 + $0x20] sm:$0xf]
      %v401 = vld [vmem:[%s236 + $0x24] sm:$0xf]
      %v402 = vld [vmem:[%s236 + $0x28] sm:$0xf]
      %v403 = vld [vmem:[%s236 + $0x2c] sm:$0xf]
      %v404 = vld [vmem:[%s236 + $0x30] sm:$0xf]
      %v405 = vld [vmem:[%s236 + $0x34] sm:$0xf]
      %v406 = vld [vmem:[%s236 + $0x38] sm:$0xf]
      %v407 = vld [vmem:[%s236 + $0x3c] sm:$0xf]
      %v408 = vld [vmem:[%s236 + $0x40] sm:$0xf]
      %v409 = vld [vmem:[%s236 + $0x44] sm:$0xf]
      %v410 = vld [vmem:[%s236 + $0x48] sm:$0xf]
      %v411 = vld [vmem:[%s236 + $0x4c] sm:$0xf]
      %v412 = vld [vmem:[%s236 + $0x50] sm:$0xf]
      %v413 = vld [vmem:[%s236 + $0x54] sm:$0xf]
      %v414 = vld [vmem:[%s236 + $0x58] sm:$0xf]
      %v415 = vld [vmem:[%s236 + $0x5c] sm:$0xf]
      %v416 = vld [vmem:[%s236 + $0x60] sm:$0xf]
      %v417 = vld [vmem:[%s236 + $0x64] sm:$0xf]
      %v418 = vld [vmem:[%s236 + $0x68] sm:$0xf]
      %v419 = vld [vmem:[%s236 + $0x6c] sm:$0xf]
      %v420 = vld [vmem:[%s236 + $0x70] sm:$0xf]
      %v421 = vld [vmem:[%s236 + $0x74] sm:$0xf]
      %v422 = vld [vmem:[%s236 + $0x78] sm:$0xf]
      %v423 = vld [vmem:[%s236 + $0x7c] sm:$0xf]
      %v424 = vld [vmem:[%s236 + $0x80] sm:$0xf]
      %v425 = vld [vmem:[%s236 + $0x84] sm:$0xf]
      %v426 = vld [vmem:[%s236 + $0x88] sm:$0xf]
      %v427 = vld [vmem:[%s236 + $0x8c] sm:$0xf]
      %v428 = vld [vmem:[%s236 + $0x90] sm:$0xf]
      %v429 = vld [vmem:[%s236 + $0x94] sm:$0xf]
      %v430 = vld [vmem:[%s236 + $0x98] sm:$0xf]
      %v431 = vld [vmem:[%s236 + $0x9c] sm:$0xf]
      %v432 = vld [vmem:[%s236 + $0xa0] sm:$0xf]
      %v433 = vld [vmem:[%s236 + $0xa4] sm:$0xf]
      %v434 = vld [vmem:[%s236 + $0xa8] sm:$0xf]
      %v435 = vld [vmem:[%s236 + $0xac] sm:$0xf]
      %v436 = vld [vmem:[%s236 + $0xb0] sm:$0xf]
      %v437 = vld [vmem:[%s236 + $0xb4] sm:$0xf]
      %v438 = vld [vmem:[%s236 + $0xb8] sm:$0xf]
      %v439 = vld [vmem:[%s236 + $0xbc] sm:$0xf]
      %v440 = vld [vmem:[%s236 + $0xc0] sm:$0xf]
      %v441 = vld [vmem:[%s236 + $0xc4] sm:$0xf]
      %v442 = vld [vmem:[%s236 + $0xc8] sm:$0xf]
      %v443 = vld [vmem:[%s236 + $0xcc] sm:$0xf]
      %v444 = vld [vmem:[%s236 + $0xd0] sm:$0xf]
      %v445 = vld [vmem:[%s236 + $0xd4] sm:$0xf]
      %v446 = vld [vmem:[%s236 + $0xd8] sm:$0xf]
      %v447 = vld [vmem:[%s236 + $0xdc] sm:$0xf]
      %v448 = vld [vmem:[%s236 + $0xe0] sm:$0xf]
      %v449 = vld [vmem:[%s236 + $0xe4] sm:$0xf]
      %v450 = vld [vmem:[%s236 + $0xe8] sm:$0xf]
      %v451 = vld [vmem:[%s236 + $0xec] sm:$0xf]
      %v452 = vld [vmem:[%s236 + $0xf0] sm:$0xf]
      %v453 = vld [vmem:[%s236 + $0xf4] sm:$0xf]
      %v454 = vld [vmem:[%s236 + $0xf8] sm:$0xf]
      %v455 = vld [vmem:[%s236 + $0xfc] sm:$0xf]
      %v456 = vld [vmem:[%s245] sm:$0xf]
      %v457 = vld [vmem:[%s245 + $0x4] sm:$0xf]
      %v458 = vld [vmem:[%s245 + $0x8] sm:$0xf]
      %v459 = vld [vmem:[%s245 + $0xc] sm:$0xf]
      %v524 = vunpack.c.l.b16 %v392
      %v525 = vunpack.c.l.b16 %v393
      %v526 = vunpack.c.l.b16 %v394
      %v527 = vunpack.c.l.b16 %v395
      %v528 = vunpack.c.l.b16 %v396
      %v529 = vunpack.c.l.b16 %v397
      %v530 = vunpack.c.l.b16 %v398
      %v531 = vunpack.c.l.b16 %v399
      %v532 = vunpack.c.l.b16 %v400
      %v533 = vunpack.c.l.b16 %v401
      %v534 = vunpack.c.l.b16 %v402
      %v535 = vunpack.c.l.b16 %v403
      %v536 = vunpack.c.l.b16 %v404
      %v537 = vunpack.c.l.b16 %v405
      %v538 = vunpack.c.l.b16 %v406
      %v539 = vunpack.c.l.b16 %v407
      %v540 = vunpack.c.l.b16 %v408
      %v541 = vunpack.c.l.b16 %v409
      %v542 = vunpack.c.l.b16 %v410
      %v543 = vunpack.c.l.b16 %v411
      %v544 = vunpack.c.l.b16 %v412
      %v545 = vunpack.c.l.b16 %v413
      %v546 = vunpack.c.l.b16 %v414
      %v547 = vunpack.c.l.b16 %v415
      %v548 = vunpack.c.l.b16 %v416
      %v549 = vunpack.c.l.b16 %v417
      %v550 = vunpack.c.l.b16 %v418
      %v551 = vunpack.c.l.b16 %v419
      %v552 = vunpack.c.l.b16 %v420
      %v553 = vunpack.c.l.b16 %v421
      %v554 = vunpack.c.l.b16 %v422
      %v555 = vunpack.c.l.b16 %v423
      %v556 = vunpack.c.l.b16 %v424
      %v557 = vunpack.c.l.b16 %v425
      %v558 = vunpack.c.l.b16 %v426
      %v559 = vunpack.c.l.b16 %v427
      %v560 = vunpack.c.l.b16 %v428
      %v561 = vunpack.c.l.b16 %v429
      %v562 = vunpack.c.l.b16 %v430
      %v563 = vunpack.c.l.b16 %v431
      %v564 = vunpack.c.l.b16 %v432
      %v565 = vunpack.c.l.b16 %v433
      %v566 = vunpack.c.l.b16 %v434
      %v567 = vunpack.c.l.b16 %v435
      %v568 = vunpack.c.l.b16 %v436
      %v569 = vunpack.c.l.b16 %v437
      %v570 = vunpack.c.l.b16 %v438
      %v571 = vunpack.c.l.b16 %v439
      %v572 = vunpack.c.l.b16 %v440
      %v573 = vunpack.c.l.b16 %v441
      %v574 = vunpack.c.l.b16 %v442
      %v575 = vunpack.c.l.b16 %v443
      %v576 = vunpack.c.l.b16 %v444
      %v577 = vunpack.c.l.b16 %v445
      %v578 = vunpack.c.l.b16 %v446
      %v579 = vunpack.c.l.b16 %v447
      %v580 = vunpack.c.l.b16 %v448
      %v581 = vunpack.c.l.b16 %v449
      %v582 = vunpack.c.l.b16 %v450
      %v583 = vunpack.c.l.b16 %v451
      %v584 = vunpack.c.l.b16 %v452
      %v585 = vunpack.c.l.b16 %v453
      %v586 = vunpack.c.l.b16 %v454
      %v587 = vunpack.c.l.b16 %v455
      %v588 = vpack.c.b16 %v525, %v524
      %v589 = vpack.c.b16 %v527, %v526
      %v590 = vpack.c.b16 %v529, %v528
      %v591 = vpack.c.b16 %v531, %v530
      %v592 = vpack.c.b16 %v533, %v532
      %v593 = vpack.c.b16 %v535, %v534
      %v594 = vpack.c.b16 %v537, %v536
      %v595 = vpack.c.b16 %v539, %v538
      %v596 = vpack.c.b16 %v541, %v540
      %v597 = vpack.c.b16 %v543, %v542
      %v598 = vpack.c.b16 %v545, %v544
      %v599 = vpack.c.b16 %v547, %v546
      %v600 = vpack.c.b16 %v549, %v548
      %v601 = vpack.c.b16 %v551, %v550
      %v602 = vpack.c.b16 %v553, %v552
      %v603 = vpack.c.b16 %v555, %v554
      %v604 = vpack.c.b16 %v557, %v556
      %v605 = vpack.c.b16 %v559, %v558
      %v606 = vpack.c.b16 %v561, %v560
      %v607 = vpack.c.b16 %v563, %v562
      %v608 = vpack.c.b16 %v565, %v564
      %v609 = vpack.c.b16 %v567, %v566
      %v610 = vpack.c.b16 %v569, %v568
      %v611 = vpack.c.b16 %v571, %v570
      %v612 = vpack.c.b16 %v573, %v572
      %v613 = vpack.c.b16 %v575, %v574
      %v614 = vpack.c.b16 %v577, %v576
      %v615 = vpack.c.b16 %v579, %v578
      %v616 = vpack.c.b16 %v581, %v580
      %v617 = vpack.c.b16 %v583, %v582
      %v618 = vpack.c.b16 %v585, %v584
      %v619 = vpack.c.b16 %v587, %v586
      %v624 = vunpack.c.l.b16 %v456
      %v625 = vunpack.c.l.b16 %v457
      %v626 = vunpack.c.l.b16 %v458
      %v627 = vunpack.c.l.b16 %v459
      %v628 = vpack.c.b16 %v625, %v624
      %v629 = vpack.c.b16 %v627, %v626
      %vm632 = vcmask 261120
      %v634 = vsel %vm632, %v588, 0
      %v637 = vsel %vm632, %v589, 0
      %v640 = vsel %vm632, %v590, 0
      %v643 = vsel %vm632, %v591, 0
      %v646 = vsel %vm632, %v592, 0
      %v649 = vsel %vm632, %v593, 0
      %v652 = vsel %vm632, %v594, 0
      %v655 = vsel %vm632, %v595, 0
      %v658 = vsel %vm632, %v596, 0
      %v661 = vsel %vm632, %v597, 0
      %v664 = vsel %vm632, %v598, 0
      %v667 = vsel %vm632, %v599, 0
      %v670 = vsel %vm632, %v600, 0
      %v673 = vsel %vm632, %v601, 0
      %v676 = vsel %vm632, %v602, 0
      %v679 = vsel %vm632, %v603, 0
      %v682 = vsel %vm632, %v604, 0
      %v685 = vsel %vm632, %v605, 0
      %v688 = vsel %vm632, %v606, 0
      %v691 = vsel %vm632, %v607, 0
      %v694 = vsel %vm632, %v608, 0
      %v697 = vsel %vm632, %v609, 0
      %v700 = vsel %vm632, %v610, 0
      %v703 = vsel %vm632, %v611, 0
      %v706 = vsel %vm632, %v612, 0
      %v709 = vsel %vm632, %v613, 0
      %v712 = vsel %vm632, %v614, 0
      %v715 = vsel %vm632, %v615, 0
      %v718 = vsel %vm632, %v616, 0
      %v721 = vsel %vm632, %v617, 0
      %v724 = vsel %vm632, %v618, 0
      %v727 = vsel %vm632, %v619, 0
      %729 = vmatprep.subr.bf16.mxu0 0
      %730 = vmatpush1.bf16.msra.mxu0 0
      %731 = vmatprep.subr.bf16.mxu0 0
      %732 = vmatpush1.bf16.msra.mxu0 0
      %733 = vmatprep.subr.bf16.mxu0 0
      %734 = vmatpush1.bf16.msra.mxu0 0
      %735 = vmatprep.subr.bf16.mxu0 0
      %736 = vmatpush1.bf16.msra.mxu0 0
      %737 = vmatprep.subr.bf16.mxu0 0
      %738 = vmatpush1.bf16.msra.mxu0 0
      %739 = vmatprep.subr.bf16.mxu0 0
      %740 = vmatpush1.bf16.msra.mxu0 0
      %741 = vmatprep.subr.bf16.mxu0 0
      %742 = vmatpush1.bf16.msra.mxu0 %v629
      %743 = vmatprep.subr.bf16.mxu0 0
      %744 = vmatpush1.bf16.msra.mxu0 %v628
      %745 = vmatprep.subr.bf16.mxu0 0
      %746 = vmatpush2.bf16.msra.mxu0 0
      %747 = vmatprep.subr.bf16.mxu0 0
      %748 = vmatpush2.bf16.msra.mxu0 0
      %749 = vmatprep.subr.bf16.mxu0 0
      %750 = vmatpush2.bf16.msra.mxu0 0
      %751 = vmatprep.subr.bf16.mxu0 0
      %752 = vmatpush2.bf16.msra.mxu0 0
      %753 = vmatprep.subr.bf16.mxu0 0
      %754 = vmatpush2.bf16.msra.mxu0 0
      %755 = vmatprep.subr.bf16.mxu0 0
      %756 = vmatpush2.bf16.msra.mxu0 0
      %757 = vmatprep.subr.bf16.mxu0 0
      %758 = vmatpush2.bf16.msra.mxu0 0
      %759 = vmatprep.subr.bf16.mxu0 0
      %760 = vmatpush2.bf16.msra.mxu0 0
      %761 = vmatprep.mubr.bf16.mxu0 0
      %762 = vmatmul.mubr.bf16.gmra.mxu0 %v634
      %v763 = vpop.f32.mrf.mxu0
      %v764 = vadd.f32 0.0, %v763
      %v765 = vpop.f32.mrf.mxu0
      %v766 = vpop.f32.mrf.mxu0
      %v767 = vadd.f32 0.0, %v766
      %v768 = vpop.f32.mrf.mxu0
      %769 = vmatprep.mubr.bf16.mxu0 0
      %770 = vmatmul.mubr.bf16.gmra.mxu0 %v637
      %v771 = vpop.f32.mrf.mxu0
      %v772 = vadd.f32 0.0, %v771
      %v773 = vpop.f32.mrf.mxu0
      %v774 = vpop.f32.mrf.mxu0
      %v775 = vadd.f32 0.0, %v774
      %v776 = vpop.f32.mrf.mxu0
      %777 = vmatprep.mubr.bf16.mxu0 0
      %778 = vmatmul.mubr.bf16.gmra.mxu0 %v640
      %v779 = vpop.f32.mrf.mxu0
      %v780 = vadd.f32 0.0, %v779
      %v781 = vpop.f32.mrf.mxu0
      %v782 = vpop.f32.mrf.mxu0
      %v783 = vadd.f32 0.0, %v782
      %v784 = vpop.f32.mrf.mxu0
      %785 = vmatprep.mubr.bf16.mxu0 0
      %786 = vmatmul.mubr.bf16.gmra.mxu0 %v643
      %v787 = vpop.f32.mrf.mxu0
      %v788 = vadd.f32 0.0, %v787
      %v789 = vpop.f32.mrf.mxu0
      %v790 = vpop.f32.mrf.mxu0
      %v791 = vadd.f32 0.0, %v790
      %v792 = vpop.f32.mrf.mxu0
      %793 = vmatprep.mubr.bf16.mxu0 0
      %794 = vmatmul.mubr.bf16.gmra.mxu0 %v646
      %v795 = vpop.f32.mrf.mxu0
      %v796 = vadd.f32 0.0, %v795
      %v797 = vpop.f32.mrf.mxu0
      %v798 = vpop.f32.mrf.mxu0
      %v799 = vadd.f32 0.0, %v798
      %v800 = vpop.f32.mrf.mxu0
      %801 = vmatprep.mubr.bf16.mxu0 0
      %802 = vmatmul.mubr.bf16.gmra.mxu0 %v649
      %v803 = vpop.f32.mrf.mxu0
      %v804 = vadd.f32 0.0, %v803
      %v805 = vpop.f32.mrf.mxu0
      %v806 = vpop.f32.mrf.mxu0
      %v807 = vadd.f32 0.0, %v806
      %v808 = vpop.f32.mrf.mxu0
      %809 = vmatprep.mubr.bf16.mxu0 0
      %810 = vmatmul.mubr.bf16.gmra.mxu0 %v652
      %v811 = vpop.f32.mrf.mxu0
      %v812 = vadd.f32 0.0, %v811
      %v813 = vpop.f32.mrf.mxu0
      %v814 = vpop.f32.mrf.mxu0
      %v815 = vadd.f32 0.0, %v814
      %v816 = vpop.f32.mrf.mxu0
      %817 = vmatprep.mubr.bf16.mxu0 0
      %818 = vmatmul.mubr.bf16.gmra.mxu0 %v655
      %v819 = vpop.f32.mrf.mxu0
      %v820 = vadd.f32 0.0, %v819
      %v821 = vpop.f32.mrf.mxu0
      %v822 = vpop.f32.mrf.mxu0
      %v823 = vadd.f32 0.0, %v822
      %v824 = vpop.f32.mrf.mxu0
      %825 = vmatprep.mubr.bf16.mxu0 0
      %826 = vmatmul.mubr.bf16.gmra.mxu0 %v658
      %v827 = vpop.f32.mrf.mxu0
      %v828 = vadd.f32 0.0, %v827
      %v829 = vpop.f32.mrf.mxu0
      %v830 = vpop.f32.mrf.mxu0
      %v831 = vadd.f32 0.0, %v830
      %v832 = vpop.f32.mrf.mxu0
      %833 = vmatprep.mubr.bf16.mxu0 0
      %834 = vmatmul.mubr.bf16.gmra.mxu0 %v661
      %v835 = vpop.f32.mrf.mxu0
      %v836 = vadd.f32 0.0, %v835
      %v837 = vpop.f32.mrf.mxu0
      %v838 = vpop.f32.mrf.mxu0
      %v839 = vadd.f32 0.0, %v838
      %v840 = vpop.f32.mrf.mxu0
      %841 = vmatprep.mubr.bf16.mxu0 0
      %842 = vmatmul.mubr.bf16.gmra.mxu0 %v664
      %v843 = vpop.f32.mrf.mxu0
      %v844 = vadd.f32 0.0, %v843
      %v845 = vpop.f32.mrf.mxu0
      %v846 = vpop.f32.mrf.mxu0
      %v847 = vadd.f32 0.0, %v846
      %v848 = vpop.f32.mrf.mxu0
      %849 = vmatprep.mubr.bf16.mxu0 0
      %850 = vmatmul.mubr.bf16.gmra.mxu0 %v667
      %v851 = vpop.f32.mrf.mxu0
      %v852 = vadd.f32 0.0, %v851
      %v853 = vpop.f32.mrf.mxu0
      %v854 = vpop.f32.mrf.mxu0
      %v855 = vadd.f32 0.0, %v854
      %v856 = vpop.f32.mrf.mxu0
      %857 = vmatprep.mubr.bf16.mxu0 0
      %858 = vmatmul.mubr.bf16.gmra.mxu0 %v670
      %v859 = vpop.f32.mrf.mxu0
      %v860 = vadd.f32 0.0, %v859
      %v861 = vpop.f32.mrf.mxu0
      %v862 = vpop.f32.mrf.mxu0
      %v863 = vadd.f32 0.0, %v862
      %v864 = vpop.f32.mrf.mxu0
      %865 = vmatprep.mubr.bf16.mxu0 0
      %866 = vmatmul.mubr.bf16.gmra.mxu0 %v673
      %v867 = vpop.f32.mrf.mxu0
      %v868 = vadd.f32 0.0, %v867
      %v869 = vpop.f32.mrf.mxu0
      %v870 = vpop.f32.mrf.mxu0
      %v871 = vadd.f32 0.0, %v870
      %v872 = vpop.f32.mrf.mxu0
      %873 = vmatprep.mubr.bf16.mxu0 0
      %874 = vmatmul.mubr.bf16.gmra.mxu0 %v676
      %v875 = vpop.f32.mrf.mxu0
      %v876 = vadd.f32 0.0, %v875
      %v877 = vpop.f32.mrf.mxu0
      %v878 = vpop.f32.mrf.mxu0
      %v879 = vadd.f32 0.0, %v878
      %v880 = vpop.f32.mrf.mxu0
      %881 = vmatprep.mubr.bf16.mxu0 0
      %882 = vmatmul.mubr.bf16.gmra.mxu0 %v679
      %v883 = vpop.f32.mrf.mxu0
      %v884 = vadd.f32 0.0, %v883
      %v885 = vpop.f32.mrf.mxu0
      %v886 = vpop.f32.mrf.mxu0
      %v887 = vadd.f32 0.0, %v886
      %v888 = vpop.f32.mrf.mxu0
      %889 = vmatprep.mubr.bf16.mxu0 0
      %890 = vmatmul.mubr.bf16.gmra.mxu0 %v682
      %v891 = vpop.f32.mrf.mxu0
      %v892 = vadd.f32 0.0, %v891
      %v893 = vpop.f32.mrf.mxu0
      %v894 = vpop.f32.mrf.mxu0
      %v895 = vadd.f32 0.0, %v894
      %v896 = vpop.f32.mrf.mxu0
      %897 = vmatprep.mubr.bf16.mxu0 0
      %898 = vmatmul.mubr.bf16.gmra.mxu0 %v685
      %v899 = vpop.f32.mrf.mxu0
      %v900 = vadd.f32 0.0, %v899
      %v901 = vpop.f32.mrf.mxu0
      %v902 = vpop.f32.mrf.mxu0
      %v903 = vadd.f32 0.0, %v902
      %v904 = vpop.f32.mrf.mxu0
      %905 = vmatprep.mubr.bf16.mxu0 0
      %906 = vmatmul.mubr.bf16.gmra.mxu0 %v688
      %v907 = vpop.f32.mrf.mxu0
      %v908 = vadd.f32 0.0, %v907
      %v909 = vpop.f32.mrf.mxu0
      %v910 = vpop.f32.mrf.mxu0
      %v911 = vadd.f32 0.0, %v910
      %v912 = vpop.f32.mrf.mxu0
      %913 = vmatprep.mubr.bf16.mxu0 0
      %914 = vmatmul.mubr.bf16.gmra.mxu0 %v691
      %v915 = vpop.f32.mrf.mxu0
      %v916 = vadd.f32 0.0, %v915
      %v917 = vpop.f32.mrf.mxu0
      %v918 = vpop.f32.mrf.mxu0
      %v919 = vadd.f32 0.0, %v918
      %v920 = vpop.f32.mrf.mxu0
      %921 = vmatprep.mubr.bf16.mxu0 0
      %922 = vmatmul.mubr.bf16.gmra.mxu0 %v694
      %v923 = vpop.f32.mrf.mxu0
      %v924 = vadd.f32 0.0, %v923
      %v925 = vpop.f32.mrf.mxu0
      %v926 = vpop.f32.mrf.mxu0
      %v927 = vadd.f32 0.0, %v926
      %v928 = vpop.f32.mrf.mxu0
      %929 = vmatprep.mubr.bf16.mxu0 0
      %930 = vmatmul.mubr.bf16.gmra.mxu0 %v697
      %v931 = vpop.f32.mrf.mxu0
      %v932 = vadd.f32 0.0, %v931
      %v933 = vpop.f32.mrf.mxu0
      %v934 = vpop.f32.mrf.mxu0
      %v935 = vadd.f32 0.0, %v934
      %v936 = vpop.f32.mrf.mxu0
      %937 = vmatprep.mubr.bf16.mxu0 0
      %938 = vmatmul.mubr.bf16.gmra.mxu0 %v700
      %v939 = vpop.f32.mrf.mxu0
      %v940 = vadd.f32 0.0, %v939
      %v941 = vpop.f32.mrf.mxu0
      %v942 = vpop.f32.mrf.mxu0
      %v943 = vadd.f32 0.0, %v942
      %v944 = vpop.f32.mrf.mxu0
      %945 = vmatprep.mubr.bf16.mxu0 0
      %946 = vmatmul.mubr.bf16.gmra.mxu0 %v703
      %v947 = vpop.f32.mrf.mxu0
      %v948 = vadd.f32 0.0, %v947
      %v949 = vpop.f32.mrf.mxu0
      %v950 = vpop.f32.mrf.mxu0
      %v951 = vadd.f32 0.0, %v950
      %v952 = vpop.f32.mrf.mxu0
      %953 = vmatprep.mubr.bf16.mxu0 0
      %954 = vmatmul.mubr.bf16.gmra.mxu0 %v706
      %v955 = vpop.f32.mrf.mxu0
      %v956 = vadd.f32 0.0, %v955
      %v957 = vpop.f32.mrf.mxu0
      %v958 = vpop.f32.mrf.mxu0
      %v959 = vadd.f32 0.0, %v958
      %v960 = vpop.f32.mrf.mxu0
      %961 = vmatprep.mubr.bf16.mxu0 0
      %962 = vmatmul.mubr.bf16.gmra.mxu0 %v709
      %v963 = vpop.f32.mrf.mxu0
      %v964 = vadd.f32 0.0, %v963
      %v965 = vpop.f32.mrf.mxu0
      %v966 = vpop.f32.mrf.mxu0
      %v967 = vadd.f32 0.0, %v966
      %v968 = vpop.f32.mrf.mxu0
      %969 = vmatprep.mubr.bf16.mxu0 0
      %970 = vmatmul.mubr.bf16.gmra.mxu0 %v712
      %v971 = vpop.f32.mrf.mxu0
      %v972 = vadd.f32 0.0, %v971
      %v973 = vpop.f32.mrf.mxu0
      %v974 = vpop.f32.mrf.mxu0
      %v975 = vadd.f32 0.0, %v974
      %v976 = vpop.f32.mrf.mxu0
      %977 = vmatprep.mubr.bf16.mxu0 0
      %978 = vmatmul.mubr.bf16.gmra.mxu0 %v715
      %v979 = vpop.f32.mrf.mxu0
      %v980 = vadd.f32 0.0, %v979
      %v981 = vpop.f32.mrf.mxu0
      %v982 = vpop.f32.mrf.mxu0
      %v983 = vadd.f32 0.0, %v982
      %v984 = vpop.f32.mrf.mxu0
      %985 = vmatprep.mubr.bf16.mxu0 0
      %986 = vmatmul.mubr.bf16.gmra.mxu0 %v718
      %v987 = vpop.f32.mrf.mxu0
      %v988 = vadd.f32 0.0, %v987
      %v989 = vpop.f32.mrf.mxu0
      %v990 = vpop.f32.mrf.mxu0
      %v991 = vadd.f32 0.0, %v990
      %v992 = vpop.f32.mrf.mxu0
      %993 = vmatprep.mubr.bf16.mxu0 0
      %994 = vmatmul.mubr.bf16.gmra.mxu0 %v721
      %v995 = vpop.f32.mrf.mxu0
      %v996 = vadd.f32 0.0, %v995
      %v997 = vpop.f32.mrf.mxu0
      %v998 = vpop.f32.mrf.mxu0
      %v999 = vadd.f32 0.0, %v998
      %v1000 = vpop.f32.mrf.mxu0
      %1001 = vmatprep.mubr.bf16.mxu0 0
      %1002 = vmatmul.mubr.bf16.gmra.mxu0 %v724
      %v1003 = vpop.f32.mrf.mxu0
      %v1004 = vadd.f32 0.0, %v1003
      %v1005 = vpop.f32.mrf.mxu0
      %v1006 = vpop.f32.mrf.mxu0
      %v1007 = vadd.f32 0.0, %v1006
      %v1008 = vpop.f32.mrf.mxu0
      %1009 = vmatprep.mubr.bf16.mxu0 0
      %1010 = vmatmul.mubr.bf16.gmra.mxu0 %v727
      %v1011 = vpop.f32.mrf.mxu0
      %v1012 = vadd.f32 0.0, %v1011
      %v1013 = vpop.f32.mrf.mxu0
      %v1014 = vpop.f32.mrf.mxu0
      %v1015 = vadd.f32 0.0, %v1014
      %v1016 = vpop.f32.mrf.mxu0
      %1017 = vdwg.mxu0
      %v1018 = vadd.f32 %v328, %v764
      %v1019 = vadd.f32 %v329, %v767
      %v1020 = vadd.f32 %v330, %v772
      %v1021 = vadd.f32 %v331, %v775
      %v1022 = vadd.f32 %v332, %v780
      %v1023 = vadd.f32 %v333, %v783
      %v1024 = vadd.f32 %v334, %v788
      %v1025 = vadd.f32 %v335, %v791
      %v1026 = vadd.f32 %v336, %v796
      %v1027 = vadd.f32 %v337, %v799
      %v1028 = vadd.f32 %v338, %v804
      %v1029 = vadd.f32 %v339, %v807
      %v1030 = vadd.f32 %v340, %v812
      %v1031 = vadd.f32 %v341, %v815
      %v1032 = vadd.f32 %v342, %v820
      %v1033 = vadd.f32 %v343, %v823
      %v1034 = vadd.f32 %v344, %v828
      %v1035 = vadd.f32 %v345, %v831
      %v1036 = vadd.f32 %v346, %v836
      %v1037 = vadd.f32 %v347, %v839
      %v1038 = vadd.f32 %v348, %v844
      %v1039 = vadd.f32 %v349, %v847
      %v1040 = vadd.f32 %v350, %v852
      %v1041 = vadd.f32 %v351, %v855
      %v1042 = vadd.f32 %v352, %v860
      %v1043 = vadd.f32 %v353, %v863
      %v1044 = vadd.f32 %v354, %v868
      %v1045 = vadd.f32 %v355, %v871
      %v1046 = vadd.f32 %v356, %v876
      %v1047 = vadd.f32 %v357, %v879
      %v1048 = vadd.f32 %v358, %v884
      %v1049 = vadd.f32 %v359, %v887
      %v1050 = vadd.f32 %v360, %v892
      %v1051 = vadd.f32 %v361, %v895
      %v1052 = vadd.f32 %v362, %v900
      %v1053 = vadd.f32 %v363, %v903
      %v1054 = vadd.f32 %v364, %v908
      %v1055 = vadd.f32 %v365, %v911
      %v1056 = vadd.f32 %v366, %v916
      %v1057 = vadd.f32 %v367, %v919
      %v1058 = vadd.f32 %v368, %v924
      %v1059 = vadd.f32 %v369, %v927
      %v1060 = vadd.f32 %v370, %v932
      %v1061 = vadd.f32 %v371, %v935
      %v1062 = vadd.f32 %v372, %v940
      %v1063 = vadd.f32 %v373, %v943
      %v1064 = vadd.f32 %v374, %v948
      %v1065 = vadd.f32 %v375, %v951
      %v1066 = vadd.f32 %v376, %v956
      %v1067 = vadd.f32 %v377, %v959
      %v1068 = vadd.f32 %v378, %v964
      %v1069 = vadd.f32 %v379, %v967
      %v1070 = vadd.f32 %v380, %v972
      %v1071 = vadd.f32 %v381, %v975
      %v1072 = vadd.f32 %v382, %v980
      %v1073 = vadd.f32 %v383, %v983
      %v1074 = vadd.f32 %v384, %v988
      %v1075 = vadd.f32 %v385, %v991
      %v1076 = vadd.f32 %v386, %v996
      %v1077 = vadd.f32 %v387, %v999
      %v1078 = vadd.f32 %v388, %v1004
      %v1079 = vadd.f32 %v389, %v1007
      %v1080 = vadd.f32 %v390, %v1012
      %v1081 = vadd.f32 %v391, %v1015
      %1082 = vst [vmem:[#allocation2] sm:$0xff] %v1018
      %1083 = vst [vmem:[#allocation2 + $0x8] sm:$0xff] %v1019
      %1084 = vst [vmem:[#allocation2 + $0x10] sm:$0xff] %v1020
      %1085 = vst [vmem:[#allocation2 + $0x18] sm:$0xff] %v1021
      %1086 = vst [vmem:[#allocation2 + $0x20] sm:$0xff] %v1022
      %1087 = vst [vmem:[#allocation2 + $0x28] sm:$0xff] %v1023
      %1088 = vst [vmem:[#allocation2 + $0x30] sm:$0xff] %v1024
      %1089 = vst [vmem:[#allocation2 + $0x38] sm:$0xff] %v1025
      %1090 = vst [vmem:[#allocation2 + $0x40] sm:$0xff] %v1026
      %1091 = vst [vmem:[#allocation2 + $0x48] sm:$0xff] %v1027
      %1092 = vst [vmem:[#allocation2 + $0x50] sm:$0xff] %v1028
      %1093 = vst [vmem:[#allocation2 + $0x58] sm:$0xff] %v1029
      %1094 = vst [vmem:[#allocation2 + $0x60] sm:$0xff] %v1030
      %1095 = vst [vmem:[#allocation2 + $0x68] sm:$0xff] %v1031
      %1096 = vst [vmem:[#allocation2 + $0x70] sm:$0xff] %v1032
      %1097 = vst [vmem:[#allocation2 + $0x78] sm:$0xff] %v1033
      %1098 = vst [vmem:[#allocation2 + $0x80] sm:$0xff] %v1034
      %1099 = vst [vmem:[#allocation2 + $0x88] sm:$0xff] %v1035
      %1100 = vst [vmem:[#allocation2 + $0x90] sm:$0xff] %v1036
      %1101 = vst [vmem:[#allocation2 + $0x98] sm:$0xff] %v1037
      %1102 = vst [vmem:[#allocation2 + $0xa0] sm:$0xff] %v1038
      %1103 = vst [vmem:[#allocation2 + $0xa8] sm:$0xff] %v1039
      %1104 = vst [vmem:[#allocation2 + $0xb0] sm:$0xff] %v1040
      %1105 = vst [vmem:[#allocation2 + $0xb8] sm:$0xff] %v1041
      %1106 = vst [vmem:[#allocation2 + $0xc0] sm:$0xff] %v1042
      %1107 = vst [vmem:[#allocation2 + $0xc8] sm:$0xff] %v1043
      %1108 = vst [vmem:[#allocation2 + $0xd0] sm:$0xff] %v1044
      %1109 = vst [vmem:[#allocation2 + $0xd8] sm:$0xff] %v1045
      %1110 = vst [vmem:[#allocation2 + $0xe0] sm:$0xff] %v1046
      %1111 = vst [vmem:[#allocation2 + $0xe8] sm:$0xff] %v1047
      %1112 = vst [vmem:[#allocation2 + $0xf0] sm:$0xff] %v1048
      %1113 = vst [vmem:[#allocation2 + $0xf8] sm:$0xff] %v1049
      %1114 = vst [vmem:[#allocation2 + $0x100] sm:$0xff] %v1050
      %1115 = vst [vmem:[#allocation2 + $0x108] sm:$0xff] %v1051
      %1116 = vst [vmem:[#allocation2 + $0x110] sm:$0xff] %v1052
      %1117 = vst [vmem:[#allocation2 + $0x118] sm:$0xff] %v1053
      %1118 = vst [vmem:[#allocation2 + $0x120] sm:$0xff] %v1054
      %1119 = vst [vmem:[#allocation2 + $0x128] sm:$0xff] %v1055
      %1120 = vst [vmem:[#allocation2 + $0x130] sm:$0xff] %v1056
      %1121 = vst [vmem:[#allocation2 + $0x138] sm:$0xff] %v1057
      %1122 = vst [vmem:[#allocation2 + $0x140] sm:$0xff] %v1058
      %1123 = vst [vmem:[#allocation2 + $0x148] sm:$0xff] %v1059
      %1124 = vst [vmem:[#allocation2 + $0x150] sm:$0xff] %v1060
      %1125 = vst [vmem:[#allocation2 + $0x158] sm:$0xff] %v1061
      %1126 = vst [vmem:[#allocation2 + $0x160] sm:$0xff] %v1062
      %1127 = vst [vmem:[#allocation2 + $0x168] sm:$0xff] %v1063
      %1128 = vst [vmem:[#allocation2 + $0x170] sm:$0xff] %v1064
      %1129 = vst [vmem:[#allocation2 + $0x178] sm:$0xff] %v1065
      %1130 = vst [vmem:[#allocation2 + $0x180] sm:$0xff] %v1066
      %1131 = vst [vmem:[#allocation2 + $0x188] sm:$0xff] %v1067
      %1132 = vst [vmem:[#allocation2 + $0x190] sm:$0xff] %v1068
      %1133 = vst [vmem:[#allocation2 + $0x198] sm:$0xff] %v1069
      %1134 = vst [vmem:[#allocation2 + $0x1a0] sm:$0xff] %v1070
      %1135 = vst [vmem:[#allocation2 + $0x1a8] sm:$0xff] %v1071
      %1136 = vst [vmem:[#allocation2 + $0x1b0] sm:$0xff] %v1072
      %1137 = vst [vmem:[#allocation2 + $0x1b8] sm:$0xff] %v1073
      %1138 = vst [vmem:[#allocation2 + $0x1c0] sm:$0xff] %v1074
      %1139 = vst [vmem:[#allocation2 + $0x1c8] sm:$0xff] %v1075
      %1140 = vst [vmem:[#allocation2 + $0x1d0] sm:$0xff] %v1076
      %1141 = vst [vmem:[#allocation2 + $0x1d8] sm:$0xff] %v1077
      %1142 = vst [vmem:[#allocation2 + $0x1e0] sm:$0xff] %v1078
      %1143 = vst [vmem:[#allocation2 + $0x1e8] sm:$0xff] %v1079
      %1144 = vst [vmem:[#allocation2 + $0x1f0] sm:$0xff] %v1080
      %1145 = vst [vmem:[#allocation2 + $0x1f8] sm:$0xff] %v1081
      // Predicated region
      $region37: #{fused_matmul.1} parent=31 // pred_check
        %p1146 = pneg %p260
      $region38: #{fused_matmul.1} parent=31 // pred_check_branch
        %1148 = sbr.rel (%p1146) target = $region40
      $region39: #{fused_matmul.1} parent=31 // pred_region
        %v1149 = vld [vmem:[#allocation2] sm:$0xff]
        %v1150 = vld [vmem:[#allocation2 + $0x8] sm:$0xff]
        %v1151 = vld [vmem:[#allocation2 + $0x10] sm:$0xff]
        %v1152 = vld [vmem:[#allocation2 + $0x18] sm:$0xff]
        %v1153 = vld [vmem:[#allocation2 + $0x20] sm:$0xff]
        %v1154 = vld [vmem:[#allocation2 + $0x28] sm:$0xff]
        %v1155 = vld [vmem:[#allocation2 + $0x30] sm:$0xff]
        %v1156 = vld [vmem:[#allocation2 + $0x38] sm:$0xff]
        %v1157 = vld [vmem:[#allocation2 + $0x40] sm:$0xff]
        %v1158 = vld [vmem:[#allocation2 + $0x48] sm:$0xff]
        %v1159 = vld [vmem:[#allocation2 + $0x50] sm:$0xff]
        %v1160 = vld [vmem:[#allocation2 + $0x58] sm:$0xff]
        %v1161 = vld [vmem:[#allocation2 + $0x60] sm:$0xff]
        %v1162 = vld [vmem:[#allocation2 + $0x68] sm:$0xff]
        %v1163 = vld [vmem:[#allocation2 + $0x70] sm:$0xff]
        %v1164 = vld [vmem:[#allocation2 + $0x78] sm:$0xff]
        %v1165 = vld [vmem:[#allocation2 + $0x80] sm:$0xff]
        %v1166 = vld [vmem:[#allocation2 + $0x88] sm:$0xff]
        %v1167 = vld [vmem:[#allocation2 + $0x90] sm:$0xff]
        %v1168 = vld [vmem:[#allocation2 + $0x98] sm:$0xff]
        %v1169 = vld [vmem:[#allocation2 + $0xa0] sm:$0xff]
        %v1170 = vld [vmem:[#allocation2 + $0xa8] sm:$0xff]
        %v1171 = vld [vmem:[#allocation2 + $0xb0] sm:$0xff]
        %v1172 = vld [vmem:[#allocation2 + $0xb8] sm:$0xff]
        %v1173 = vld [vmem:[#allocation2 + $0xc0] sm:$0xff]
        %v1174 = vld [vmem:[#allocation2 + $0xc8] sm:$0xff]
        %v1175 = vld [vmem:[#allocation2 + $0xd0] sm:$0xff]
        %v1176 = vld [vmem:[#allocation2 + $0xd8] sm:$0xff]
        %v1177 = vld [vmem:[#allocation2 + $0xe0] sm:$0xff]
        %v1178 = vld [vmem:[#allocation2 + $0xe8] sm:$0xff]
        %v1179 = vld [vmem:[#allocation2 + $0xf0] sm:$0xff]
        %v1180 = vld [vmem:[#allocation2 + $0xf8] sm:$0xff]
        %v1181 = vld [vmem:[#allocation2 + $0x100] sm:$0xff]
        %v1182 = vld [vmem:[#allocation2 + $0x108] sm:$0xff]
        %v1183 = vld [vmem:[#allocation2 + $0x110] sm:$0xff]
        %v1184 = vld [vmem:[#allocation2 + $0x118] sm:$0xff]
        %v1185 = vld [vmem:[#allocation2 + $0x120] sm:$0xff]
        %v1186 = vld [vmem:[#allocation2 + $0x128] sm:$0xff]
        %v1187 = vld [vmem:[#allocation2 + $0x130] sm:$0xff]
        %v1188 = vld [vmem:[#allocation2 + $0x138] sm:$0xff]
        %v1189 = vld [vmem:[#allocation2 + $0x140] sm:$0xff]
        %v1190 = vld [vmem:[#allocation2 + $0x148] sm:$0xff]
        %v1191 = vld [vmem:[#allocation2 + $0x150] sm:$0xff]
        %v1192 = vld [vmem:[#allocation2 + $0x158] sm:$0xff]
        %v1193 = vld [vmem:[#allocation2 + $0x160] sm:$0xff]
        %v1194 = vld [vmem:[#allocation2 + $0x168] sm:$0xff]
        %v1195 = vld [vmem:[#allocation2 + $0x170] sm:$0xff]
        %v1196 = vld [vmem:[#allocation2 + $0x178] sm:$0xff]
        %v1197 = vld [vmem:[#allocation2 + $0x180] sm:$0xff]
        %v1198 = vld [vmem:[#allocation2 + $0x188] sm:$0xff]
        %v1199 = vld [vmem:[#allocation2 + $0x190] sm:$0xff]
        %v1200 = vld [vmem:[#allocation2 + $0x198] sm:$0xff]
        %v1201 = vld [vmem:[#allocation2 + $0x1a0] sm:$0xff]
        %v1202 = vld [vmem:[#allocation2 + $0x1a8] sm:$0xff]
        %v1203 = vld [vmem:[#allocation2 + $0x1b0] sm:$0xff]
        %v1204 = vld [vmem:[#allocation2 + $0x1b8] sm:$0xff]
        %v1205 = vld [vmem:[#allocation2 + $0x1c0] sm:$0xff]
        %v1206 = vld [vmem:[#allocation2 + $0x1c8] sm:$0xff]
        %v1207 = vld [vmem:[#allocation2 + $0x1d0] sm:$0xff]
        %v1208 = vld [vmem:[#allocation2 + $0x1d8] sm:$0xff]
        %v1209 = vld [vmem:[#allocation2 + $0x1e0] sm:$0xff]
        %v1210 = vld [vmem:[#allocation2 + $0x1e8] sm:$0xff]
        %v1211 = vld [vmem:[#allocation2 + $0x1f0] sm:$0xff]
        %v1212 = vld [vmem:[#allocation2 + $0x1f8] sm:$0xff]
        %v1213 = vld [vmem:[%s249] sm:$0x1]
        %v1215 = vlaneseq
        %v1216 = vshrl.u32 %v1215, 7
        %v1217 = vsub.s32 0, %v1216
        %v1218 = vrot.slane %v1213, %v1217
        %v1220 = vadd.f32 %v1149, %v1218
        %v1221 = vadd.f32 %v1150, %v1218
        %v1222 = vadd.f32 %v1151, %v1218
        %v1223 = vadd.f32 %v1152, %v1218
        %v1224 = vadd.f32 %v1153, %v1218
        %v1225 = vadd.f32 %v1154, %v1218
        %v1226 = vadd.f32 %v1155, %v1218
        %v1227 = vadd.f32 %v1156, %v1218
        %v1228 = vadd.f32 %v1157, %v1218
        %v1229 = vadd.f32 %v1158, %v1218
        %v1230 = vadd.f32 %v1159, %v1218
        %v1231 = vadd.f32 %v1160, %v1218
        %v1232 = vadd.f32 %v1161, %v1218
        %v1233 = vadd.f32 %v1162, %v1218
        %v1234 = vadd.f32 %v1163, %v1218
        %v1235 = vadd.f32 %v1164, %v1218
        %v1236 = vadd.f32 %v1165, %v1218
        %v1237 = vadd.f32 %v1166, %v1218
        %v1238 = vadd.f32 %v1167, %v1218
        %v1239 = vadd.f32 %v1168, %v1218
        %v1240 = vadd.f32 %v1169, %v1218
        %v1241 = vadd.f32 %v1170, %v1218
        %v1242 = vadd.f32 %v1171, %v1218
        %v1243 = vadd.f32 %v1172, %v1218
        %v1244 = vadd.f32 %v1173, %v1218
        %v1245 = vadd.f32 %v1174, %v1218
        %v1246 = vadd.f32 %v1175, %v1218
        %v1247 = vadd.f32 %v1176, %v1218
        %v1248 = vadd.f32 %v1177, %v1218
        %v1249 = vadd.f32 %v1178, %v1218
        %v1250 = vadd.f32 %v1179, %v1218
        %v1251 = vadd.f32 %v1180, %v1218
        %v1252 = vadd.f32 %v1181, %v1218
        %v1253 = vadd.f32 %v1182, %v1218
        %v1254 = vadd.f32 %v1183, %v1218
        %v1255 = vadd.f32 %v1184, %v1218
        %v1256 = vadd.f32 %v1185, %v1218
        %v1257 = vadd.f32 %v1186, %v1218
        %v1258 = vadd.f32 %v1187, %v1218
        %v1259 = vadd.f32 %v1188, %v1218
        %v1260 = vadd.f32 %v1189, %v1218
        %v1261 = vadd.f32 %v1190, %v1218
        %v1262 = vadd.f32 %v1191, %v1218
        %v1263 = vadd.f32 %v1192, %v1218
        %v1264 = vadd.f32 %v1193, %v1218
        %v1265 = vadd.f32 %v1194, %v1218
        %v1266 = vadd.f32 %v1195, %v1218
        %v1267 = vadd.f32 %v1196, %v1218
        %v1268 = vadd.f32 %v1197, %v1218
        %v1269 = vadd.f32 %v1198, %v1218
        %v1270 = vadd.f32 %v1199, %v1218
        %v1271 = vadd.f32 %v1200, %v1218
        %v1272 = vadd.f32 %v1201, %v1218
        %v1273 = vadd.f32 %v1202, %v1218
        %v1274 = vadd.f32 %v1203, %v1218
        %v1275 = vadd.f32 %v1204, %v1218
        %v1276 = vadd.f32 %v1205, %v1218
        %v1277 = vadd.f32 %v1206, %v1218
        %v1278 = vadd.f32 %v1207, %v1218
        %v1279 = vadd.f32 %v1208, %v1218
        %v1280 = vadd.f32 %v1209, %v1218
        %v1281 = vadd.f32 %v1210, %v1218
        %v1282 = vadd.f32 %v1211, %v1218
        %v1283 = vadd.f32 %v1212, %v1218
        %vm1284 = vcmp.ge.f32.partialorder %v1220, 0.0
        %vm1285 = vcmp.ge.f32.partialorder %v1221, 0.0
        %vm1286 = vcmp.ge.f32.partialorder %v1222, 0.0
        %vm1287 = vcmp.ge.f32.partialorder %v1223, 0.0
        %vm1288 = vcmp.ge.f32.partialorder %v1224, 0.0
        %vm1289 = vcmp.ge.f32.partialorder %v1225, 0.0
        %vm1290 = vcmp.ge.f32.partialorder %v1226, 0.0
        %vm1291 = vcmp.ge.f32.partialorder %v1227, 0.0
        %vm1292 = vcmp.ge.f32.partialorder %v1228, 0.0
        %vm1293 = vcmp.ge.f32.partialorder %v1229, 0.0
        %vm1294 = vcmp.ge.f32.partialorder %v1230, 0.0
        %vm1295 = vcmp.ge.f32.partialorder %v1231, 0.0
        %vm1296 = vcmp.ge.f32.partialorder %v1232, 0.0
        %vm1297 = vcmp.ge.f32.partialorder %v1233, 0.0
        %vm1298 = vcmp.ge.f32.partialorder %v1234, 0.0
        %vm1299 = vcmp.ge.f32.partialorder %v1235, 0.0
        %vm1300 = vcmp.ge.f32.partialorder %v1236, 0.0
        %vm1301 = vcmp.ge.f32.partialorder %v1237, 0.0
        %vm1302 = vcmp.ge.f32.partialorder %v1238, 0.0
        %vm1303 = vcmp.ge.f32.partialorder %v1239, 0.0
        %vm1304 = vcmp.ge.f32.partialorder %v1240, 0.0
        %vm1305 = vcmp.ge.f32.partialorder %v1241, 0.0
        %vm1306 = vcmp.ge.f32.partialorder %v1242, 0.0
        %vm1307 = vcmp.ge.f32.partialorder %v1243, 0.0
        %vm1308 = vcmp.ge.f32.partialorder %v1244, 0.0
        %vm1309 = vcmp.ge.f32.partialorder %v1245, 0.0
        %vm1310 = vcmp.ge.f32.partialorder %v1246, 0.0
        %vm1311 = vcmp.ge.f32.partialorder %v1247, 0.0
        %vm1312 = vcmp.ge.f32.partialorder %v1248, 0.0
        %vm1313 = vcmp.ge.f32.partialorder %v1249, 0.0
        %vm1314 = vcmp.ge.f32.partialorder %v1250, 0.0
        %vm1315 = vcmp.ge.f32.partialorder %v1251, 0.0
        %vm1316 = vcmp.ge.f32.partialorder %v1252, 0.0
        %vm1317 = vcmp.ge.f32.partialorder %v1253, 0.0
        %vm1318 = vcmp.ge.f32.partialorder %v1254, 0.0
        %vm1319 = vcmp.ge.f32.partialorder %v1255, 0.0
        %vm1320 = vcmp.ge.f32.partialorder %v1256, 0.0
        %vm1321 = vcmp.ge.f32.partialorder %v1257, 0.0
        %vm1322 = vcmp.ge.f32.partialorder %v1258, 0.0
        %vm1323 = vcmp.ge.f32.partialorder %v1259, 0.0
        %vm1324 = vcmp.ge.f32.partialorder %v1260, 0.0
        %vm1325 = vcmp.ge.f32.partialorder %v1261, 0.0
        %vm1326 = vcmp.ge.f32.partialorder %v1262, 0.0
        %vm1327 = vcmp.ge.f32.partialorder %v1263, 0.0
        %vm1328 = vcmp.ge.f32.partialorder %v1264, 0.0
        %vm1329 = vcmp.ge.f32.partialorder %v1265, 0.0
        %vm1330 = vcmp.ge.f32.partialorder %v1266, 0.0
        %vm1331 = vcmp.ge.f32.partialorder %v1267, 0.0
        %vm1332 = vcmp.ge.f32.partialorder %v1268, 0.0
        %vm1333 = vcmp.ge.f32.partialorder %v1269, 0.0
        %vm1334 = vcmp.ge.f32.partialorder %v1270, 0.0
        %vm1335 = vcmp.ge.f32.partialorder %v1271, 0.0
        %vm1336 = vcmp.ge.f32.partialorder %v1272, 0.0
        %vm1337 = vcmp.ge.f32.partialorder %v1273, 0.0
        %vm1338 = vcmp.ge.f32.partialorder %v1274, 0.0
        %vm1339 = vcmp.ge.f32.partialorder %v1275, 0.0
        %vm1340 = vcmp.ge.f32.partialorder %v1276, 0.0
        %vm1341 = vcmp.ge.f32.partialorder %v1277, 0.0
        %vm1342 = vcmp.ge.f32.partialorder %v1278, 0.0
        %vm1343 = vcmp.ge.f32.partialorder %v1279, 0.0
        %vm1344 = vcmp.ge.f32.partialorder %v1280, 0.0
        %vm1345 = vcmp.ge.f32.partialorder %v1281, 0.0
        %vm1346 = vcmp.ge.f32.partialorder %v1282, 0.0
        %vm1347 = vcmp.ge.f32.partialorder %v1283, 0.0
        %v1348 = vmul.f32 %v1220, 0.1
        %v1349 = vmul.f32 %v1221, 0.1
        %v1350 = vmul.f32 %v1222, 0.1
        %v1351 = vmul.f32 %v1223, 0.1
        %v1352 = vmul.f32 %v1224, 0.1
        %v1353 = vmul.f32 %v1225, 0.1
        %v1354 = vmul.f32 %v1226, 0.1
        %v1355 = vmul.f32 %v1227, 0.1
        %v1356 = vmul.f32 %v1228, 0.1
        %v1357 = vmul.f32 %v1229, 0.1
        %v1358 = vmul.f32 %v1230, 0.1
        %v1359 = vmul.f32 %v1231, 0.1
        %v1360 = vmul.f32 %v1232, 0.1
        %v1361 = vmul.f32 %v1233, 0.1
        %v1362 = vmul.f32 %v1234, 0.1
        %v1363 = vmul.f32 %v1235, 0.1
        %v1364 = vmul.f32 %v1236, 0.1
        %v1365 = vmul.f32 %v1237, 0.1
        %v1366 = vmul.f32 %v1238, 0.1
        %v1367 = vmul.f32 %v1239, 0.1
        %v1368 = vmul.f32 %v1240, 0.1
        %v1369 = vmul.f32 %v1241, 0.1
        %v1370 = vmul.f32 %v1242, 0.1
        %v1371 = vmul.f32 %v1243, 0.1
        %v1372 = vmul.f32 %v1244, 0.1
        %v1373 = vmul.f32 %v1245, 0.1
        %v1374 = vmul.f32 %v1246, 0.1
        %v1375 = vmul.f32 %v1247, 0.1
        %v1376 = vmul.f32 %v1248, 0.1
        %v1377 = vmul.f32 %v1249, 0.1
        %v1378 = vmul.f32 %v1250, 0.1
        %v1379 = vmul.f32 %v1251, 0.1
        %v1380 = vmul.f32 %v1252, 0.1
        %v1381 = vmul.f32 %v1253, 0.1
        %v1382 = vmul.f32 %v1254, 0.1
        %v1383 = vmul.f32 %v1255, 0.1
        %v1384 = vmul.f32 %v1256, 0.1
        %v1385 = vmul.f32 %v1257, 0.1
        %v1386 = vmul.f32 %v1258, 0.1
        %v1387 = vmul.f32 %v1259, 0.1
        %v1388 = vmul.f32 %v1260, 0.1
        %v1389 = vmul.f32 %v1261, 0.1
        %v1390 = vmul.f32 %v1262, 0.1
        %v1391 = vmul.f32 %v1263, 0.1
        %v1392 = vmul.f32 %v1264, 0.1
        %v1393 = vmul.f32 %v1265, 0.1
        %v1394 = vmul.f32 %v1266, 0.1
        %v1395 = vmul.f32 %v1267, 0.1
        %v1396 = vmul.f32 %v1268, 0.1
        %v1397 = vmul.f32 %v1269, 0.1
        %v1398 = vmul.f32 %v1270, 0.1
        %v1399 = vmul.f32 %v1271, 0.1
        %v1400 = vmul.f32 %v1272, 0.1
        %v1401 = vmul.f32 %v1273, 0.1
        %v1402 = vmul.f32 %v1274, 0.1
        %v1403 = vmul.f32 %v1275, 0.1
        %v1404 = vmul.f32 %v1276, 0.1
        %v1405 = vmul.f32 %v1277, 0.1
        %v1406 = vmul.f32 %v1278, 0.1
        %v1407 = vmul.f32 %v1279, 0.1
        %v1408 = vmul.f32 %v1280, 0.1
        %v1409 = vmul.f32 %v1281, 0.1
        %v1410 = vmul.f32 %v1282, 0.1
        %v1411 = vmul.f32 %v1283, 0.1
        %v1412 = vsel %vm1284, %v1220, %v1348
        %v1413 = vsel %vm1285, %v1221, %v1349
        %v1414 = vsel %vm1286, %v1222, %v1350
        %v1415 = vsel %vm1287, %v1223, %v1351
        %v1416 = vsel %vm1288, %v1224, %v1352
        %v1417 = vsel %vm1289, %v1225, %v1353
        %v1418 = vsel %vm1290, %v1226, %v1354
        %v1419 = vsel %vm1291, %v1227, %v1355
        %v1420 = vsel %vm1292, %v1228, %v1356
        %v1421 = vsel %vm1293, %v1229, %v1357
        %v1422 = vsel %vm1294, %v1230, %v1358
        %v1423 = vsel %vm1295, %v1231, %v1359
        %v1424 = vsel %vm1296, %v1232, %v1360
        %v1425 = vsel %vm1297, %v1233, %v1361
        %v1426 = vsel %vm1298, %v1234, %v1362
        %v1427 = vsel %vm1299, %v1235, %v1363
        %v1428 = vsel %vm1300, %v1236, %v1364
        %v1429 = vsel %vm1301, %v1237, %v1365
        %v1430 = vsel %vm1302, %v1238, %v1366
        %v1431 = vsel %vm1303, %v1239, %v1367
        %v1432 = vsel %vm1304, %v1240, %v1368
        %v1433 = vsel %vm1305, %v1241, %v1369
        %v1434 = vsel %vm1306, %v1242, %v1370
        %v1435 = vsel %vm1307, %v1243, %v1371
        %v1436 = vsel %vm1308, %v1244, %v1372
        %v1437 = vsel %vm1309, %v1245, %v1373
        %v1438 = vsel %vm1310, %v1246, %v1374
        %v1439 = vsel %vm1311, %v1247, %v1375
        %v1440 = vsel %vm1312, %v1248, %v1376
        %v1441 = vsel %vm1313, %v1249, %v1377
        %v1442 = vsel %vm1314, %v1250, %v1378
        %v1443 = vsel %vm1315, %v1251, %v1379
        %v1444 = vsel %vm1316, %v1252, %v1380
        %v1445 = vsel %vm1317, %v1253, %v1381
        %v1446 = vsel %vm1318, %v1254, %v1382
        %v1447 = vsel %vm1319, %v1255, %v1383
        %v1448 = vsel %vm1320, %v1256, %v1384
        %v1449 = vsel %vm1321, %v1257, %v1385
        %v1450 = vsel %vm1322, %v1258, %v1386
        %v1451 = vsel %vm1323, %v1259, %v1387
        %v1452 = vsel %vm1324, %v1260, %v1388
        %v1453 = vsel %vm1325, %v1261, %v1389
        %v1454 = vsel %vm1326, %v1262, %v1390
        %v1455 = vsel %vm1327, %v1263, %v1391
        %v1456 = vsel %vm1328, %v1264, %v1392
        %v1457 = vsel %vm1329, %v1265, %v1393
        %v1458 = vsel %vm1330, %v1266, %v1394
        %v1459 = vsel %vm1331, %v1267, %v1395
        %v1460 = vsel %vm1332, %v1268, %v1396
        %v1461 = vsel %vm1333, %v1269, %v1397
        %v1462 = vsel %vm1334, %v1270, %v1398
        %v1463 = vsel %vm1335, %v1271, %v1399
        %v1464 = vsel %vm1336, %v1272, %v1400
        %v1465 = vsel %vm1337, %v1273, %v1401
        %v1466 = vsel %vm1338, %v1274, %v1402
        %v1467 = vsel %vm1339, %v1275, %v1403
        %v1468 = vsel %vm1340, %v1276, %v1404
        %v1469 = vsel %vm1341, %v1277, %v1405
        %v1470 = vsel %vm1342, %v1278, %v1406
        %v1471 = vsel %vm1343, %v1279, %v1407
        %v1472 = vsel %vm1344, %v1280, %v1408
        %v1473 = vsel %vm1345, %v1281, %v1409
        %v1474 = vsel %vm1346, %v1282, %v1410
        %v1475 = vsel %vm1347, %v1283, %v1411
        %v1476 = vpack.c.bf16 %v1413, %v1412
        %v1477 = vpack.c.bf16 %v1415, %v1414
        %v1478 = vpack.c.bf16 %v1417, %v1416
        %v1479 = vpack.c.bf16 %v1419, %v1418
        %v1480 = vpack.c.bf16 %v1421, %v1420
        %v1481 = vpack.c.bf16 %v1423, %v1422
        %v1482 = vpack.c.bf16 %v1425, %v1424
        %v1483 = vpack.c.bf16 %v1427, %v1426
        %v1484 = vpack.c.bf16 %v1429, %v1428
        %v1485 = vpack.c.bf16 %v1431, %v1430
        %v1486 = vpack.c.bf16 %v1433, %v1432
        %v1487 = vpack.c.bf16 %v1435, %v1434
        %v1488 = vpack.c.bf16 %v1437, %v1436
        %v1489 = vpack.c.bf16 %v1439, %v1438
        %v1490 = vpack.c.bf16 %v1441, %v1440
        %v1491 = vpack.c.bf16 %v1443, %v1442
        %v1492 = vpack.c.bf16 %v1445, %v1444
        %v1493 = vpack.c.bf16 %v1447, %v1446
        %v1494 = vpack.c.bf16 %v1449, %v1448
        %v1495 = vpack.c.bf16 %v1451, %v1450
        %v1496 = vpack.c.bf16 %v1453, %v1452
        %v1497 = vpack.c.bf16 %v1455, %v1454
        %v1498 = vpack.c.bf16 %v1457, %v1456
        %v1499 = vpack.c.bf16 %v1459, %v1458
        %v1500 = vpack.c.bf16 %v1461, %v1460
        %v1501 = vpack.c.bf16 %v1463, %v1462
        %v1502 = vpack.c.bf16 %v1465, %v1464
        %v1503 = vpack.c.bf16 %v1467, %v1466
        %v1504 = vpack.c.bf16 %v1469, %v1468
        %v1505 = vpack.c.bf16 %v1471, %v1470
        %v1506 = vpack.c.bf16 %v1473, %v1472
        %v1507 = vpack.c.bf16 %v1475, %v1474
        %v1540 = vunpack.c.l.b16 %v1476
        %v1541 = vunpack.c.h.b16 %v1476
        %v1542 = vunpack.c.l.b16 %v1477
        %v1543 = vunpack.c.h.b16 %v1477
        %v1544 = vunpack.c.l.b16 %v1478
        %v1545 = vunpack.c.h.b16 %v1478
        %v1546 = vunpack.c.l.b16 %v1479
        %v1547 = vunpack.c.h.b16 %v1479
        %v1548 = vunpack.c.l.b16 %v1480
        %v1549 = vunpack.c.h.b16 %v1480
        %v1550 = vunpack.c.l.b16 %v1481
        %v1551 = vunpack.c.h.b16 %v1481
        %v1552 = vunpack.c.l.b16 %v1482
        %v1553 = vunpack.c.h.b16 %v1482
        %v1554 = vunpack.c.l.b16 %v1483
        %v1555 = vunpack.c.h.b16 %v1483
        %v1556 = vunpack.c.l.b16 %v1484
        %v1557 = vunpack.c.h.b16 %v1484
        %v1558 = vunpack.c.l.b16 %v1485
        %v1559 = vunpack.c.h.b16 %v1485
        %v1560 = vunpack.c.l.b16 %v1486
        %v1561 = vunpack.c.h.b16 %v1486
        %v1562 = vunpack.c.l.b16 %v1487
        %v1563 = vunpack.c.h.b16 %v1487
        %v1564 = vunpack.c.l.b16 %v1488
        %v1565 = vunpack.c.h.b16 %v1488
        %v1566 = vunpack.c.l.b16 %v1489
        %v1567 = vunpack.c.h.b16 %v1489
        %v1568 = vunpack.c.l.b16 %v1490
        %v1569 = vunpack.c.h.b16 %v1490
        %v1570 = vunpack.c.l.b16 %v1491
        %v1571 = vunpack.c.h.b16 %v1491
        %v1572 = vunpack.c.l.b16 %v1492
        %v1573 = vunpack.c.h.b16 %v1492
        %v1574 = vunpack.c.l.b16 %v1493
        %v1575 = vunpack.c.h.b16 %v1493
        %v1576 = vunpack.c.l.b16 %v1494
        %v1577 = vunpack.c.h.b16 %v1494
        %v1578 = vunpack.c.l.b16 %v1495
        %v1579 = vunpack.c.h.b16 %v1495
        %v1580 = vunpack.c.l.b16 %v1496
        %v1581 = vunpack.c.h.b16 %v1496
        %v1582 = vunpack.c.l.b16 %v1497
        %v1583 = vunpack.c.h.b16 %v1497
        %v1584 = vunpack.c.l.b16 %v1498
        %v1585 = vunpack.c.h.b16 %v1498
        %v1586 = vunpack.c.l.b16 %v1499
        %v1587 = vunpack.c.h.b16 %v1499
        %v1588 = vunpack.c.l.b16 %v1500
        %v1589 = vunpack.c.h.b16 %v1500
        %v1590 = vunpack.c.l.b16 %v1501
        %v1591 = vunpack.c.h.b16 %v1501
        %v1592 = vunpack.c.l.b16 %v1502
        %v1593 = vunpack.c.h.b16 %v1502
        %v1594 = vunpack.c.l.b16 %v1503
        %v1595 = vunpack.c.h.b16 %v1503
        %v1596 = vunpack.c.l.b16 %v1504
        %v1597 = vunpack.c.h.b16 %v1504
        %v1598 = vunpack.c.l.b16 %v1505
        %v1599 = vunpack.c.h.b16 %v1505
        %v1600 = vunpack.c.l.b16 %v1506
        %v1601 = vunpack.c.h.b16 %v1506
        %v1602 = vunpack.c.l.b16 %v1507
        %v1603 = vunpack.c.h.b16 %v1507
        %v1604 = vpack.c.b16 %v1540, %v1540
        %v1605 = vpack.c.b16 %v1541, %v1541
        %v1606 = vpack.c.b16 %v1542, %v1542
        %v1607 = vpack.c.b16 %v1543, %v1543
        %v1608 = vpack.c.b16 %v1544, %v1544
        %v1609 = vpack.c.b16 %v1545, %v1545
        %v1610 = vpack.c.b16 %v1546, %v1546
        %v1611 = vpack.c.b16 %v1547, %v1547
        %v1612 = vpack.c.b16 %v1548, %v1548
        %v1613 = vpack.c.b16 %v1549, %v1549
        %v1614 = vpack.c.b16 %v1550, %v1550
        %v1615 = vpack.c.b16 %v1551, %v1551
        %v1616 = vpack.c.b16 %v1552, %v1552
        %v1617 = vpack.c.b16 %v1553, %v1553
        %v1618 = vpack.c.b16 %v1554, %v1554
        %v1619 = vpack.c.b16 %v1555, %v1555
        %v1620 = vpack.c.b16 %v1556, %v1556
        %v1621 = vpack.c.b16 %v1557, %v1557
        %v1622 = vpack.c.b16 %v1558, %v1558
        %v1623 = vpack.c.b16 %v1559, %v1559
        %v1624 = vpack.c.b16 %v1560, %v1560
        %v1625 = vpack.c.b16 %v1561, %v1561
        %v1626 = vpack.c.b16 %v1562, %v1562
        %v1627 = vpack.c.b16 %v1563, %v1563
        %v1628 = vpack.c.b16 %v1564, %v1564
        %v1629 = vpack.c.b16 %v1565, %v1565
        %v1630 = vpack.c.b16 %v1566, %v1566
        %v1631 = vpack.c.b16 %v1567, %v1567
        %v1632 = vpack.c.b16 %v1568, %v1568
        %v1633 = vpack.c.b16 %v1569, %v1569
        %v1634 = vpack.c.b16 %v1570, %v1570
        %v1635 = vpack.c.b16 %v1571, %v1571
        %v1636 = vpack.c.b16 %v1572, %v1572
        %v1637 = vpack.c.b16 %v1573, %v1573
        %v1638 = vpack.c.b16 %v1574, %v1574
        %v1639 = vpack.c.b16 %v1575, %v1575
        %v1640 = vpack.c.b16 %v1576, %v1576
        %v1641 = vpack.c.b16 %v1577, %v1577
        %v1642 = vpack.c.b16 %v1578, %v1578
        %v1643 = vpack.c.b16 %v1579, %v1579
        %v1644 = vpack.c.b16 %v1580, %v1580
        %v1645 = vpack.c.b16 %v1581, %v1581
        %v1646 = vpack.c.b16 %v1582, %v1582
        %v1647 = vpack.c.b16 %v1583, %v1583
        %v1648 = vpack.c.b16 %v1584, %v1584
        %v1649 = vpack.c.b16 %v1585, %v1585
        %v1650 = vpack.c.b16 %v1586, %v1586
        %v1651 = vpack.c.b16 %v1587, %v1587
        %v1652 = vpack.c.b16 %v1588, %v1588
        %v1653 = vpack.c.b16 %v1589, %v1589
        %v1654 = vpack.c.b16 %v1590, %v1590
        %v1655 = vpack.c.b16 %v1591, %v1591
        %v1656 = vpack.c.b16 %v1592, %v1592
        %v1657 = vpack.c.b16 %v1593, %v1593
        %v1658 = vpack.c.b16 %v1594, %v1594
        %v1659 = vpack.c.b16 %v1595, %v1595
        %v1660 = vpack.c.b16 %v1596, %v1596
        %v1661 = vpack.c.b16 %v1597, %v1597
        %v1662 = vpack.c.b16 %v1598, %v1598
        %v1663 = vpack.c.b16 %v1599, %v1599
        %v1664 = vpack.c.b16 %v1600, %v1600
        %v1665 = vpack.c.b16 %v1601, %v1601
        %v1666 = vpack.c.b16 %v1602, %v1602
        %v1667 = vpack.c.b16 %v1603, %v1603
        %1732 = vst [vmem:[%s257] sm:$0xf] %v1604
        %1733 = vst [vmem:[%s257 + $0x4] sm:$0xf] %v1605
        %1734 = vst [vmem:[%s257 + $0x8] sm:$0xf] %v1606
        %1735 = vst [vmem:[%s257 + $0xc] sm:$0xf] %v1607
        %1736 = vst [vmem:[%s257 + $0x10] sm:$0xf] %v1608
        %1737 = vst [vmem:[%s257 + $0x14] sm:$0xf] %v1609
        %1738 = vst [vmem:[%s257 + $0x18] sm:$0xf] %v1610
        %1739 = vst [vmem:[%s257 + $0x1c] sm:$0xf] %v1611
        %1740 = vst [vmem:[%s257 + $0x20] sm:$0xf] %v1612
        %1741 = vst [vmem:[%s257 + $0x24] sm:$0xf] %v1613
        %1742 = vst [vmem:[%s257 + $0x28] sm:$0xf] %v1614
        %1743 = vst [vmem:[%s257 + $0x2c] sm:$0xf] %v1615
        %1744 = vst [vmem:[%s257 + $0x30] sm:$0xf] %v1616
        %1745 = vst [vmem:[%s257 + $0x34] sm:$0xf] %v1617
        %1746 = vst [vmem:[%s257 + $0x38] sm:$0xf] %v1618
        %1747 = vst [vmem:[%s257 + $0x3c] sm:$0xf] %v1619
        %1748 = vst [vmem:[%s257 + $0x40] sm:$0xf] %v1620
        %1749 = vst [vmem:[%s257 + $0x44] sm:$0xf] %v1621
        %1750 = vst [vmem:[%s257 + $0x48] sm:$0xf] %v1622
        %1751 = vst [vmem:[%s257 + $0x4c] sm:$0xf] %v1623
        %1752 = vst [vmem:[%s257 + $0x50] sm:$0xf] %v1624
        %1753 = vst [vmem:[%s257 + $0x54] sm:$0xf] %v1625
        %1754 = vst [vmem:[%s257 + $0x58] sm:$0xf] %v1626
        %1755 = vst [vmem:[%s257 + $0x5c] sm:$0xf] %v1627
        %1756 = vst [vmem:[%s257 + $0x60] sm:$0xf] %v1628
        %1757 = vst [vmem:[%s257 + $0x64] sm:$0xf] %v1629
        %1758 = vst [vmem:[%s257 + $0x68] sm:$0xf] %v1630
        %1759 = vst [vmem:[%s257 + $0x6c] sm:$0xf] %v1631
        %1760 = vst [vmem:[%s257 + $0x70] sm:$0xf] %v1632
        %1761 = vst [vmem:[%s257 + $0x74] sm:$0xf] %v1633
        %1762 = vst [vmem:[%s257 + $0x78] sm:$0xf] %v1634
        %1763 = vst [vmem:[%s257 + $0x7c] sm:$0xf] %v1635
        %1764 = vst [vmem:[%s257 + $0x80] sm:$0xf] %v1636
        %1765 = vst [vmem:[%s257 + $0x84] sm:$0xf] %v1637
        %1766 = vst [vmem:[%s257 + $0x88] sm:$0xf] %v1638
        %1767 = vst [vmem:[%s257 + $0x8c] sm:$0xf] %v1639
        %1768 = vst [vmem:[%s257 + $0x90] sm:$0xf] %v1640
        %1769 = vst [vmem:[%s257 + $0x94] sm:$0xf] %v1641
        %1770 = vst [vmem:[%s257 + $0x98] sm:$0xf] %v1642
        %1771 = vst [vmem:[%s257 + $0x9c] sm:$0xf] %v1643
        %1772 = vst [vmem:[%s257 + $0xa0] sm:$0xf] %v1644
        %1773 = vst [vmem:[%s257 + $0xa4] sm:$0xf] %v1645
        %1774 = vst [vmem:[%s257 + $0xa8] sm:$0xf] %v1646
        %1775 = vst [vmem:[%s257 + $0xac] sm:$0xf] %v1647
        %1776 = vst [vmem:[%s257 + $0xb0] sm:$0xf] %v1648
        %1777 = vst [vmem:[%s257 + $0xb4] sm:$0xf] %v1649
        %1778 = vst [vmem:[%s257 + $0xb8] sm:$0xf] %v1650
        %1779 = vst [vmem:[%s257 + $0xbc] sm:$0xf] %v1651
        %1780 = vst [vmem:[%s257 + $0xc0] sm:$0xf] %v1652
        %1781 = vst [vmem:[%s257 + $0xc4] sm:$0xf] %v1653
        %1782 = vst [vmem:[%s257 + $0xc8] sm:$0xf] %v1654
        %1783 = vst [vmem:[%s257 + $0xcc] sm:$0xf] %v1655
        %1784 = vst [vmem:[%s257 + $0xd0] sm:$0xf] %v1656
        %1785 = vst [vmem:[%s257 + $0xd4] sm:$0xf] %v1657
        %1786 = vst [vmem:[%s257 + $0xd8] sm:$0xf] %v1658
        %1787 = vst [vmem:[%s257 + $0xdc] sm:$0xf] %v1659
        %1788 = vst [vmem:[%s257 + $0xe0] sm:$0xf] %v1660
        %1789 = vst [vmem:[%s257 + $0xe4] sm:$0xf] %v1661
        %1790 = vst [vmem:[%s257 + $0xe8] sm:$0xf] %v1662
        %1791 = vst [vmem:[%s257 + $0xec] sm:$0xf] %v1663
        %1792 = vst [vmem:[%s257 + $0xf0] sm:$0xf] %v1664
        %1793 = vst [vmem:[%s257 + $0xf4] sm:$0xf] %v1665
        %1794 = vst [vmem:[%s257 + $0xf8] sm:$0xf] %v1666
        %1795 = vst [vmem:[%s257 + $0xfc] sm:$0xf] %v1667
      $region40: #{fused_matmul.1} parent=31 // pred_fallthru
        _
      %s1796 = smul.u32 64, %s19
      %p1797 = scmp.lt.s32.totalorder %s1796, 255
      %s1798 = scalar_select %p1797, %s1796, 255
      %p1799 = scmp.lt.s32.totalorder %s20, 0
      %s1800 = scalar_select %p1799, %s20, 0
      %s1801 = sadd.s32 %s1800, %s1798
      %s1802 = smul.addr %s1801, 4
      %s1803 = scalar_lea.vmem %s3, %s1802
      // Predicated region
      $region41: #{fused_matmul.1} parent=31 // pred_check
        %p1804 = pneg %p135
      $region42: #{fused_matmul.1} parent=31 // pred_check_branch
        %1806 = sbr.rel (%p1804) target = $region44
      $region43: #{fused_matmul.1} parent=31 // pred_region
        %s1807 = smul.u32 64, %s19
      $region44: #{fused_matmul.1} parent=31 // pred_fallthru
        _
    $region32: #{fused_matmul.1} parent=5 // pred_fallthru
      _
    %p1808 = scmp.le.s32.totalorder 2, %s9
    // Predicated region
    $region45: #{fused_matmul.1} parent=5 // pred_check
      %p1809 = pneg %p1808
    $region46: #{fused_matmul.1} parent=5 // pred_check_branch
      %1811 = sbr.rel (%p1809) target = $region48
    $region47: #{fused_matmul.1} parent=5 // pred_region
      %s1812 = ssub.s32 %s9, 2
      // Predicated region
      $region49: #{fused_matmul.1} parent=47 // pred_check
        %p1813 = pneg %p141
      $region50: #{fused_matmul.1} parent=47 // pred_check_branch
        %1815 = sbr.rel (%p1813) target = $region52
      $region51: #{fused_matmul.1} parent=47 // pred_region
        %s1816 = smul.u32 64, %s22
        %p1817 = scmp.lt.s32.totalorder %s1816, 255
        %s1818 = scalar_select %p1817, %s1816, 255
        %p1819 = scmp.lt.s32.totalorder %s23, 0
        %s1820 = scalar_select %p1819, %s23, 0
        %s1821 = sadd.s32 %s1820, %s1818
        %s1822 = smul.addr %s1821, 4
        %s1823 = scalar_lea.vmem %s3, %s1822
      $region52: #{fused_matmul.1} parent=47 // pred_fallthru
        _
    $region48: #{fused_matmul.1} parent=5 // pred_fallthru
      _
  $region6: #{fused_matmul.1} parent=0 // loop_footer
    %s13 = sadd.s32 1, %s9
  $region7: #{fused_matmul.1} parent=0 // loop_footer_branch
    %8 = sbr.rel target = $region3
  $region8: #{fused_matmul.1} parent=0 // loop_exit
    _

</llo_original>
